<compile_context>
chip_gen: v6e
topology: v6e:2x2x1
jax: 0.10.0
libtpu: 0.0.40
codegen_flags: <defaults>
</compile_context>

<pallas_src>
import functools

import jax
import jax.numpy as jnp
from jax.experimental import pallas as pl
from jax.experimental.pallas import tpu as pltpu

LANE = 128        # pad K and Cout to multiples of this (lane-dense, full MXU)
SUBLANE = 8
MAX_TILE_M = 1024  # v5e/v6e HBM roofline ~85% at 1024-row tiles
MIN_TILE_M = 256
MAX_TILE_K = 2048  # beyond this, K becomes a grid axis with an f32 accumulator
VMEM_BUDGET = 20 * 1024 * 1024   # target working set per kernel step
VMEM_LIMIT = 48 * 1024 * 1024    # scoped-VMEM limit (< v7x 64 MiB physical)


def _round_up(x, m):
    return (x + m - 1) // m * m


# --------------------------------------------------------------------------
# Pallas kernels
# --------------------------------------------------------------------------
def _conv_act_kernel(x_ref, w_ref, b_ref, o_ref, acc_ref, *, mode,
                     negative_slope=0.2):
    # grid = (M tiles, K tiles); K is the reduction axis ("arbitrary", last).
    # x: (TM, TK) bf16, w: (TK, Cp) bf16, b: (1, Cp) f32, o: (TM, Cp) out dtype
    @pl.when(pl.program_id(1) == 0)
    def _():
        acc_ref[...] = jnp.zeros_like(acc_ref)

    acc_ref[...] += jnp.dot(x_ref[...], w_ref[...],
                            preferred_element_type=jnp.float32)

    @pl.when(pl.program_id(1) == pl.num_programs(1) - 1)
    def _():
        y = acc_ref[...] + b_ref[...]
        if mode == "leaky":
            y = jnp.where(y >= 0.0, y, negative_slope * y)
        elif mode == "sigmoid":
            y = jax.nn.sigmoid(y)
        else:
            raise ValueError(mode)
        o_ref[...] = y.astype(o_ref.dtype)


def _conv_stats_kernel(x_ref, w_ref, y_ref, stats_ref, acc_ref):
    # Conv matmul for a BatchNorm layer (bias omitted: cancelled exactly by
    # the mean subtraction).  Emits bf16 pre-BN activations plus one packed
    # per-tile stats block: sublane 0 = sum, sublane 1 = sum-of-squares
    # (computed from the f32 accumulator).  Padded M rows are exact zeros so
    # the batch statistics stay exact.
    @pl.when(pl.program_id(1) == 0)
    def _():
        acc_ref[...] = jnp.zeros_like(acc_ref)

    acc_ref[...] += jnp.dot(x_ref[...], w_ref[...],
                            preferred_element_type=jnp.float32)

    @pl.when(pl.program_id(1) == pl.num_programs(1) - 1)
    def _():
        y = acc_ref[...]
        y_ref[...] = y.astype(y_ref.dtype)
        c = y.shape[1]
        s = jnp.sum(y, axis=0, keepdims=True)        # (1, Cp)
        ss = jnp.sum(y * y, axis=0, keepdims=True)   # (1, Cp)
        row = jax.lax.broadcasted_iota(jnp.int32, (SUBLANE, c), 0)
        packed = jnp.where(row == 0, jnp.broadcast_to(s, (SUBLANE, c)),
                           jnp.where(row == 1,
                                     jnp.broadcast_to(ss, (SUBLANE, c)),
                                     0.0))
        stats_ref[...] = packed[None]


def _bn_leaky_kernel(y_ref, scale_ref, shift_ref, o_ref, *, negative_slope=0.2):
    y = y_ref[...].astype(jnp.float32) * scale_ref[...] + shift_ref[...]
    o_ref[...] = jnp.where(y >= 0.0, y, negative_slope * y).astype(o_ref.dtype)


# --------------------------------------------------------------------------
# pallas_call wrappers (tiled over M, K reduction axis, lane-dense Cout)
# --------------------------------------------------------------------------
def conv_act(patches, w, b, mode, tile_m, tile_k, out_dtype):
    m_pad, k_pad = patches.shape
    c_pad = w.shape[1]
    grid = (m_pad // tile_m, k_pad // tile_k)
    kernel = functools.partial(_conv_act_kernel, mode=mode)
    return pl.pallas_call(
        kernel,
        out_shape=jax.ShapeDtypeStruct((m_pad, c_pad), out_dtype),
        grid=grid,
        in_specs=[
            pl.BlockSpec((tile_m, tile_k), lambda i, k: (i, k)),
            pl.BlockSpec((tile_k, c_pad), lambda i, k: (k, 0)),
            pl.BlockSpec((1, c_pad), lambda i, k: (0, 0)),
        ],
        out_specs=pl.BlockSpec((tile_m, c_pad), lambda i, k: (i, 0)),
        scratch_shapes=[pltpu.VMEM((tile_m, c_pad), jnp.float32)],
        compiler_params=pltpu.CompilerParams(
            dimension_semantics=("parallel", "arbitrary"),
            vmem_limit_bytes=VMEM_LIMIT),
    )(patches, w, b)


def conv_stats(patches, w, tile_m, tile_k):
    m_pad, k_pad = patches.shape
    c_pad = w.shape[1]
    grid_m = m_pad // tile_m
    grid = (grid_m, k_pad // tile_k)
    return pl.pallas_call(
        _conv_stats_kernel,
        out_shape=(
            jax.ShapeDtypeStruct((m_pad, c_pad), jnp.bfloat16),
            jax.ShapeDtypeStruct((grid_m, SUBLANE, c_pad), jnp.float32),
        ),
        grid=grid,
        in_specs=[
            pl.BlockSpec((tile_m, tile_k), lambda i, k: (i, k)),
            pl.BlockSpec((tile_k, c_pad), lambda i, k: (k, 0)),
        ],
        out_specs=(
            pl.BlockSpec((tile_m, c_pad), lambda i, k: (i, 0)),
            pl.BlockSpec((1, SUBLANE, c_pad), lambda i, k: (i, 0, 0)),
        ),
        scratch_shapes=[pltpu.VMEM((tile_m, c_pad), jnp.float32)],
        compiler_params=pltpu.CompilerParams(
            dimension_semantics=("parallel", "arbitrary"),
            vmem_limit_bytes=VMEM_LIMIT),
    )(patches, w)


def bn_leaky_apply(y, scale, shift, tile_m):
    m_pad, c_pad = y.shape
    grid_m = m_pad // tile_m
    return pl.pallas_call(
        _bn_leaky_kernel,
        out_shape=jax.ShapeDtypeStruct((m_pad, c_pad), jnp.bfloat16),
        grid=(grid_m,),
        in_specs=[
            pl.BlockSpec((tile_m, c_pad), lambda i: (i, 0)),
            pl.BlockSpec((1, c_pad), lambda i: (0, 0)),
            pl.BlockSpec((1, c_pad), lambda i: (0, 0)),
        ],
        out_specs=pl.BlockSpec((tile_m, c_pad), lambda i: (i, 0)),
        compiler_params=pltpu.CompilerParams(
            dimension_semantics=("parallel",),
            vmem_limit_bytes=VMEM_LIMIT),
    )(y, scale, shift)


# --------------------------------------------------------------------------
# Tiling choice (VMEM-budgeted, multi-TC friendly)
# --------------------------------------------------------------------------
def _choose_tiles(M, K, c_pad):
    k_pad = _round_up(K, LANE)
    tile_k = min(k_pad, MAX_TILE_K)
    k_pad = _round_up(K, tile_k)

    def vmem_bytes(tm):
        return (2 * tm * tile_k * 2        # bf16 patch block, double-buffered
                + 2 * tile_k * c_pad * 2   # bf16 weight block, double-buffered
                + 2 * tm * c_pad * 2       # bf16 output block, double-buffered
                + tm * c_pad * 4)          # f32 accumulator scratch

    if M > MAX_TILE_M:
        tile_m = MAX_TILE_M
        while tile_m > MIN_TILE_M and vmem_bytes(tile_m) > VMEM_BUDGET:
            tile_m //= 2
        m_pad = _round_up(M, tile_m)
    elif M > SUBLANE:
        # Small layer: still emit >= 2 M-tiles so the "parallel" M axis can
        # shard across v7x's two TensorCores.
        tile_m = _round_up(-(-M // 2), SUBLANE)
        m_pad = 2 * tile_m
    else:
        tile_m = _round_up(max(M, 1), SUBLANE)
        m_pad = tile_m
    return tile_m, m_pad, tile_k, k_pad


# --------------------------------------------------------------------------
# Glue: im2col + weight reshaping + padding (plain JAX, fused under jit)
# --------------------------------------------------------------------------
def im2col(x_nhwc, k, stride, pad):
    N, H, W, C = x_nhwc.shape
    x_p = jnp.pad(x_nhwc, ((0, 0), (pad, pad), (pad, pad), (0, 0)))
    Ho = (H + 2 * pad - k) // stride + 1
    Wo = (W + 2 * pad - k) // stride + 1
    pieces = []
    for dh in range(k):
        for dw in range(k):
            pieces.append(
                x_p[:, dh:dh + (Ho - 1) * stride + 1:stride,
                       dw:dw + (Wo - 1) * stride + 1:stride, :])
    p = jnp.concatenate(pieces, axis=-1)           # last-dim order: (kh,kw,Cin)
    return p.reshape(N * Ho * Wo, k * k * C), (N, Ho, Wo)


def weight_to_matrix(w_oihw):
    # (Cout, Cin, kh, kw) -> (kh*kw*Cin, Cout), matching im2col ordering.
    Cout, Cin, kh, kw = w_oihw.shape
    return jnp.transpose(w_oihw, (2, 3, 1, 0)).reshape(kh * kw * Cin, Cout)


def _pad2d(a, rows, cols):
    r, c = a.shape
    if r == rows and c == cols:
        return a
    return jnp.pad(a, ((0, rows - r), (0, cols - c)))


def _pad1d(v, n, value=0.0):
    c = v.shape[0]
    if c == n:
        return v
    return jnp.pad(v, (0, n - c), constant_values=value)


# --------------------------------------------------------------------------
# Parameter init (matches the PyTorch __init__ distributions)
# --------------------------------------------------------------------------
def init_discriminator_params(key, input_dim, filter_sizes, output_dim, k=4):
    layers = []
    chans = [input_dim] + list(filter_sizes)
    for i in range(len(filter_sizes)):
        key, sub = jax.random.split(key)
        w = 0.02 * jax.random.normal(sub, (chans[i + 1], chans[i], k, k),
                                     jnp.float32)
        b = jnp.zeros((chans[i + 1],), jnp.float32)
        layer = {"w": w, "b": b, "stride": 2, "padding": 1,
                 "mode": "leaky" if i == 0 else "bn_leaky"}
        if i > 0:
            layer["gamma"] = jnp.ones((chans[i + 1],), jnp.float32)
            layer["beta"] = jnp.zeros((chans[i + 1],), jnp.float32)
        layers.append(layer)
    key, sub = jax.random.split(key)
    w = 0.02 * jax.random.normal(sub, (output_dim, chans[-1], k, k),
                                 jnp.float32)
    layers.append({"w": w, "b": jnp.zeros((output_dim,), jnp.float32),
                   "stride": 1, "padding": 0, "mode": "sigmoid"})
    return layers


# --------------------------------------------------------------------------
# Forward pass
# --------------------------------------------------------------------------
def _layer_forward(x_nhwc, layer, k, eps=1e-5):
    stride, pad = layer["stride"], layer["padding"]
    # x_nhwc is already bf16, so the patch matrix is built in bf16 directly.
    patches, (N, Ho, Wo) = im2col(x_nhwc, k, stride, pad)
    M, K = patches.shape
    Cout = layer["w"].shape[0]

    c_pad = _round_up(Cout, LANE)        # lane-dense output (no masked vst)
    tile_m, m_pad, tile_k, k_pad = _choose_tiles(M, K, c_pad)

    wmat = _pad2d(weight_to_matrix(layer["w"]), k_pad, c_pad).astype(jnp.bfloat16)
    patches_p = _pad2d(patches, m_pad, k_pad)      # pad only; already bf16

    if layer["mode"] == "bn_leaky":
        # Conv bias skipped: it is cancelled exactly by the mean subtraction.
        y, stats = conv_stats(patches_p, wmat, tile_m, tile_k)
        total = jnp.sum(stats[:, 0, :], axis=0)        # (c_pad,)
        total_sq = jnp.sum(stats[:, 1, :], axis=0)     # (c_pad,)
        mean = total / M                               # biased (training) stats
        var = jnp.maximum(total_sq / M - mean * mean, 0.0)
        gamma = _pad1d(layer["gamma"], c_pad, 1.0)
        beta = _pad1d(layer["beta"], c_pad, 0.0)
        scale = gamma * jax.lax.rsqrt(var + eps)
        shift = beta - mean * scale
        out = bn_leaky_apply(y,
                             scale.reshape(1, c_pad).astype(jnp.float32),
                             shift.reshape(1, c_pad).astype(jnp.float32),
                             tile_m)
    else:
        out_dtype = jnp.float32 if layer["mode"] == "sigmoid" else jnp.bfloat16
        b = _pad1d(layer["b"], c_pad, 0.0).reshape(1, c_pad).astype(jnp.float32)
        out = conv_act(patches_p, wmat, b, layer["mode"], tile_m, tile_k,
                       out_dtype)

    return out[:M, :Cout].reshape(N, Ho, Wo, Cout)


def discriminator_forward(images_nchw, layers, k=4):
    # NCHW -> NHWC once; cast to bf16 once, before any im2col expansion.
    x = jnp.transpose(images_nchw, (0, 2, 3, 1)).astype(jnp.bfloat16)
    for layer in layers:
        x = _layer_forward(x, layer, k)
    return jnp.transpose(x, (0, 3, 1, 2)).astype(jnp.float32)  # back to NCHW


# --------------------------------------------------------------------------
# Pure-JAX / f32 reference (correctness check of the Pallas path)
# --------------------------------------------------------------------------
def reference_forward(images_nchw, layers, eps=1e-5):
    x = images_nchw
    for layer in layers:
        s, p = layer["stride"], layer["padding"]
        y = jax.lax.conv_general_dilated(
            x, layer["w"], (s, s), [(p, p), (p, p)],
            dimension_numbers=("NCHW", "OIHW", "NCHW"))
        y = y + layer["b"][None, :, None, None]
        if layer["mode"] == "bn_leaky":
            mean = jnp.mean(y, axis=(0, 2, 3), keepdims=True)
            var = jnp.mean(jnp.square(y - mean), axis=(0, 2, 3), keepdims=True)
            y = (y - mean) * jax.lax.rsqrt(var + eps)
            y = (y * layer["gamma"][None, :, None, None]
                 + layer["beta"][None, :, None, None])
            y = jnp.where(y >= 0.0, y, 0.2 * y)
        elif layer["mode"] == "leaky":
            y = jnp.where(y >= 0.0, y, 0.2 * y)
        else:
            y = jax.nn.sigmoid(y)
        x = y
    return x


if __name__ == "__main__":
    key = jax.random.PRNGKey(0)
    input_dim, filter_sizes, output_dim = 3, [8, 16], 1
    N, H, W = 2, 16, 16  # 16 -> 8 -> 4 -> (4x4 valid conv) -> 1

    params = init_discriminator_params(key, input_dim, filter_sizes, output_dim)
    images = jax.random.normal(jax.random.fold_in(key, 999),
                               (N, input_dim, H, W), jnp.float32)

    fwd = jax.jit(lambda imgs: discriminator_forward(imgs, params))
    out = jax.block_until_ready(fwd(images))

    ref = reference_forward(images, params)
    assert out.shape == (N, output_dim, 1, 1), out.shape
    # bf16 operands + bf16 inter-layer tensors (f32 accumulation/statistics)
    # -> tolerance loosened vs pure-f32.
    err = float(jnp.max(jnp.abs(out - ref)))
    assert err < 3e-2, err
    print("KERNEL_OK")
</pallas_src>

<mosaic_0001>
module attributes {stable_mosaic.version = 11 : i64} {
  func.func @_conv_act_kernel(%arg0: i32, %arg1: i32, %arg2: memref<64x128xbf16, #tpu.memory_space<vmem>>, %arg3: memref<128x128xbf16, #tpu.memory_space<vmem>>, %arg4: memref<1x128xf32, #tpu.memory_space<vmem>>, %arg5: memref<64x128xbf16, #tpu.memory_space<vmem>>, %arg6: memref<64x128xf32, #tpu.memory_space<vmem>>) attributes {dimension_semantics = [#tpu.dimension_semantics<parallel>, #tpu.dimension_semantics<arbitrary>], iteration_bounds = array<i64: 2, 1>, scalar_prefetch = 0 : i64, scratch_operands = 1 : i64, tpu.core_type = #tpu.core_type<tc>, window_params = [{transform_indices = @transform_0, window_bounds = array<i64: 64, 128>}, {transform_indices = @transform_1, window_bounds = array<i64: 128, 128>}, {pipeline_mode = #tpu.pipeline_mode<synchronous>, transform_indices = @transform_2, window_bounds = array<i64: 1, 128>}, {transform_indices = @transform_3, window_bounds = array<i64: 64, 128>}]} {
    %c0_i32 = arith.constant 0 : i32
    %0 = arith.cmpi eq, %arg1, %c0_i32 : i32
    %1 = arith.extui %0 : i1 to i32
    %c0_i32_0 = arith.constant 0 : i32
    %2 = arith.cmpi ne, %1, %c0_i32_0 : i32
    scf.if %2 {
      %cst_10 = arith.constant 0.000000e+00 : f32
      %12 = vector.broadcast %cst_10 : f32 to vector<64x128xf32>
      %c0_11 = arith.constant 0 : index
      %c0_12 = arith.constant 0 : index
      %13 = vector.load %arg6[%c0_11, %c0_12] : memref<64x128xf32, #tpu.memory_space<vmem>>, vector<64x128xf32>
      tpu.vector_store %arg6[%c0_11, %c0_12], %12 {strides = array<i32>} : memref<64x128xf32, #tpu.memory_space<vmem>>, vector<64x128xf32>,
    } else {
    }
    %c0 = arith.constant 0 : index
    %c0_1 = arith.constant 0 : index
    %3 = vector.load %arg6[%c0, %c0_1] : memref<64x128xf32, #tpu.memory_space<vmem>>, vector<64x128xf32>
    %c0_2 = arith.constant 0 : index
    %c0_3 = arith.constant 0 : index
    %4 = vector.load %arg2[%c0_2, %c0_3] : memref<64x128xbf16, #tpu.memory_space<vmem>>, vector<64x128xbf16>
    %c0_4 = arith.constant 0 : index
    %c0_5 = arith.constant 0 : index
    %5 = vector.load %arg3[%c0_4, %c0_5] : memref<128x128xbf16, #tpu.memory_space<vmem>>, vector<128x128xbf16>
    %cst = arith.constant dense<0.000000e+00> : vector<64x128xf32>
    %6 = tpu.matmul %4, %5, %cst {dimension_numbers = #tpu.dot_dimension_numbers<[1], [0], [0], [1], [0, 0, 1, 1], [], []>} : vector<64x128xbf16>, vector<128x128xbf16>, vector<64x128xf32> -> vector<64x128xf32>
    %7 = arith.addf %3, %6 : vector<64x128xf32>
    %c0_6 = arith.constant 0 : index
    %c0_7 = arith.constant 0 : index
    %8 = vector.load %arg6[%c0_6, %c0_7] : memref<64x128xf32, #tpu.memory_space<vmem>>, vector<64x128xf32>
    tpu.vector_store %arg6[%c0_6, %c0_7], %7 {strides = array<i32>} : memref<64x128xf32, #tpu.memory_space<vmem>>, vector<64x128xf32>,
    %c0_i32_8 = arith.constant 0 : i32
    %9 = arith.cmpi eq, %arg1, %c0_i32_8 : i32
    %10 = arith.extui %9 : i1 to i32
    %c0_i32_9 = arith.constant 0 : i32
    %11 = arith.cmpi ne, %10, %c0_i32_9 : i32
    scf.if %11 {
      %c0_10 = arith.constant 0 : index
      %c0_11 = arith.constant 0 : index
      %12 = vector.load %arg6[%c0_10, %c0_11] : memref<64x128xf32, #tpu.memory_space<vmem>>, vector<64x128xf32>
      %c0_12 = arith.constant 0 : index
      %c0_13 = arith.constant 0 : index
      %13 = vector.load %arg4[%c0_12, %c0_13] : memref<1x128xf32, #tpu.memory_space<vmem>>, vector<1x128xf32>
      %14 = vector.broadcast %13 : vector<1x128xf32> to vector<64x128xf32>
      %15 = arith.addf %12, %14 : vector<64x128xf32>
      %cst_14 = arith.constant 0.000000e+00 : f32
      %16 = vector.broadcast %cst_14 : f32 to vector<64x128xf32>
      %17 = arith.cmpf oge, %15, %16 : vector<64x128xf32>
      %cst_15 = arith.constant 2.000000e-01 : f32
      %18 = vector.broadcast %cst_15 : f32 to vector<64x128xf32>
      %19 = arith.mulf %18, %15 : vector<64x128xf32>
      %20 = arith.select %17, %15, %19 : vector<64x128xi1>, vector<64x128xf32>
      %21 = arith.truncf %20 : vector<64x128xf32> to vector<64x128xbf16>
      %c0_16 = arith.constant 0 : index
      %c0_17 = arith.constant 0 : index
      %22 = vector.load %arg5[%c0_16, %c0_17] : memref<64x128xbf16, #tpu.memory_space<vmem>>, vector<64x128xbf16>
      tpu.vector_store %arg5[%c0_16, %c0_17], %21 {strides = array<i32>} : memref<64x128xbf16, #tpu.memory_space<vmem>>, vector<64x128xbf16>,
    } else {
    }
    return
  }
  func.func @transform_0(%arg0: i32, %arg1: i32) -> (i32, i32) {
    %c0_i32 = arith.constant 0 : i32
    return %arg0, %arg1 : i32, i32
  }
  func.func @transform_1(%arg0: i32, %arg1: i32) -> (i32, i32) {
    %c0_i32 = arith.constant 0 : i32
    %c0_i32_0 = arith.constant 0 : i32
    return %arg1, %c0_i32 : i32, i32
  }
  func.func @transform_2(%arg0: i32, %arg1: i32) -> (i32, i32) {
    %c0_i32 = arith.constant 0 : i32
    %c0_i32_0 = arith.constant 0 : i32
    %c0_i32_1 = arith.constant 0 : i32
    return %c0_i32, %c0_i32_0 : i32, i32
  }
  func.func @transform_3(%arg0: i32, %arg1: i32) -> (i32, i32) {
    %c0_i32 = arith.constant 0 : i32
    %c0_i32_0 = arith.constant 0 : i32
    return %arg0, %c0_i32 : i32, i32
  }
}

module attributes {stable_mosaic.version = 11 : i64} {
  func.func @_conv_stats_kernel(%arg0: i32, %arg1: i32, %arg2: memref<16x128xbf16, #tpu.memory_space<vmem>>, %arg3: memref<128x128xbf16, #tpu.memory_space<vmem>>, %arg4: memref<16x128xbf16, #tpu.memory_space<vmem>>, %arg5: memref<1x8x128xf32, #tpu.memory_space<vmem>>, %arg6: memref<16x128xf32, #tpu.memory_space<vmem>>) attributes {dimension_semantics = [#tpu.dimension_semantics<parallel>, #tpu.dimension_semantics<arbitrary>], iteration_bounds = array<i64: 2, 1>, scalar_prefetch = 0 : i64, scratch_operands = 1 : i64, tpu.core_type = #tpu.core_type<tc>, window_params = [{transform_indices = @transform_0, window_bounds = array<i64: 16, 128>}, {transform_indices = @transform_1, window_bounds = array<i64: 128, 128>}, {transform_indices = @transform_2, window_bounds = array<i64: 16, 128>}, {transform_indices = @transform_3, window_bounds = array<i64: 1, 8, 128>}]} {
    %c0_i32 = arith.constant 0 : i32
    %0 = arith.cmpi eq, %arg1, %c0_i32 : i32
    %1 = arith.extui %0 : i1 to i32
    %c0_i32_0 = arith.constant 0 : i32
    %2 = arith.cmpi ne, %1, %c0_i32_0 : i32
    scf.if %2 {
      %cst_10 = arith.constant 0.000000e+00 : f32
      %12 = vector.broadcast %cst_10 : f32 to vector<16x128xf32>
      %c0_11 = arith.constant 0 : index
      %c0_12 = arith.constant 0 : index
      %13 = vector.load %arg6[%c0_11, %c0_12] : memref<16x128xf32, #tpu.memory_space<vmem>>, vector<16x128xf32>
      tpu.vector_store %arg6[%c0_11, %c0_12], %12 {strides = array<i32>} : memref<16x128xf32, #tpu.memory_space<vmem>>, vector<16x128xf32>,
    } else {
    }
    %c0 = arith.constant 0 : index
    %c0_1 = arith.constant 0 : index
    %3 = vector.load %arg6[%c0, %c0_1] : memref<16x128xf32, #tpu.memory_space<vmem>>, vector<16x128xf32>
    %c0_2 = arith.constant 0 : index
    %c0_3 = arith.constant 0 : index
    %4 = vector.load %arg2[%c0_2, %c0_3] : memref<16x128xbf16, #tpu.memory_space<vmem>>, vector<16x128xbf16>
    %c0_4 = arith.constant 0 : index
    %c0_5 = arith.constant 0 : index
    %5 = vector.load %arg3[%c0_4, %c0_5] : memref<128x128xbf16, #tpu.memory_space<vmem>>, vector<128x128xbf16>
    %cst = arith.constant dense<0.000000e+00> : vector<16x128xf32>
    %6 = tpu.matmul %4, %5, %cst {dimension_numbers = #tpu.dot_dimension_numbers<[1], [0], [0], [1], [0, 0, 1, 1], [], []>} : vector<16x128xbf16>, vector<128x128xbf16>, vector<16x128xf32> -> vector<16x128xf32>
    %7 = arith.addf %3, %6 : vector<16x128xf32>
    %c0_6 = arith.constant 0 : index
    %c0_7 = arith.constant 0 : index
    %8 = vector.load %arg6[%c0_6, %c0_7] : memref<16x128xf32, #tpu.memory_space<vmem>>, vector<16x128xf32>
    tpu.vector_store %arg6[%c0_6, %c0_7], %7 {strides = array<i32>} : memref<16x128xf32, #tpu.memory_space<vmem>>, vector<16x128xf32>,
    %c0_i32_8 = arith.constant 0 : i32
    %9 = arith.cmpi eq, %arg1, %c0_i32_8 : i32
    %10 = arith.extui %9 : i1 to i32
    %c0_i32_9 = arith.constant 0 : i32
    %11 = arith.cmpi ne, %10, %c0_i32_9 : i32
    scf.if %11 {
      %c0_10 = arith.constant 0 : index
      %c0_11 = arith.constant 0 : index
      %12 = vector.load %arg6[%c0_10, %c0_11] : memref<16x128xf32, #tpu.memory_space<vmem>>, vector<16x128xf32>
      %13 = arith.truncf %12 : vector<16x128xf32> to vector<16x128xbf16>
      %c0_12 = arith.constant 0 : index
      %c0_13 = arith.constant 0 : index
      %14 = vector.load %arg4[%c0_12, %c0_13] : memref<16x128xbf16, #tpu.memory_space<vmem>>, vector<16x128xbf16>
      tpu.vector_store %arg4[%c0_12, %c0_13], %13 {strides = array<i32>} : memref<16x128xbf16, #tpu.memory_space<vmem>>, vector<16x128xbf16>,
      %cst_14 = arith.constant dense<0.000000e+00> : vector<128xf32>
      %15 = vector.multi_reduction <add>, %12, %cst_14 [0] : vector<16x128xf32> to vector<128xf32>
      %16 = vector.shape_cast %15 : vector<128xf32> to vector<1x128xf32>
      %17 = arith.mulf %12, %12 : vector<16x128xf32>
      %cst_15 = arith.constant dense<0.000000e+00> : vector<128xf32>
      %18 = vector.multi_reduction <add>, %17, %cst_15 [0] : vector<16x128xf32> to vector<128xf32>
      %19 = vector.shape_cast %18 : vector<128xf32> to vector<1x128xf32>
      %20 = tpu.iota {dimensions = array<i32: 0>} : vector<8x128xi32>
      %c0_i32_16 = arith.constant 0 : i32
      %21 = vector.broadcast %c0_i32_16 : i32 to vector<8x128xi32>
      %22 = arith.cmpi eq, %20, %21 : vector<8x128xi32>
      %23 = vector.shape_cast %16 : vector<1x128xf32> to vector<1x128xf32>
      %24 = vector.broadcast %23 : vector<1x128xf32> to vector<8x128xf32>
      %c1_i32 = arith.constant 1 : i32
      %25 = vector.broadcast %c1_i32 : i32 to vector<8x128xi32>
      %26 = arith.cmpi eq, %20, %25 : vector<8x128xi32>
      %27 = vector.shape_cast %19 : vector<1x128xf32> to vector<1x128xf32>
      %28 = vector.broadcast %27 : vector<1x128xf32> to vector<8x128xf32>
      %cst_17 = arith.constant 0.000000e+00 : f32
      %29 = vector.broadcast %cst_17 : f32 to vector<8x128xf32>
      %30 = arith.select %26, %28, %29 : vector<8x128xi1>, vector<8x128xf32>
      %31 = arith.select %22, %24, %30 : vector<8x128xi1>, vector<8x128xf32>
      %32 = vector.shape_cast %31 : vector<8x128xf32> to vector<1x8x128xf32>
      %c0_18 = arith.constant 0 : index
      %c0_19 = arith.constant 0 : index
      %c0_20 = arith.constant 0 : index
      %33 = vector.load %arg5[%c0_18, %c0_19, %c0_20] : memref<1x8x128xf32, #tpu.memory_space<vmem>>, vector<1x8x128xf32>
      tpu.vector_store %arg5[%c0_18, %c0_19, %c0_20], %32 {strides = array<i32>} : memref<1x8x128xf32, #tpu.memory_space<vmem>>, vector<1x8x128xf32>,
    } else {
    }
    return
  }
  func.func @transform_0(%arg0: i32, %arg1: i32) -> (i32, i32) {
    %c0_i32 = arith.constant 0 : i32
    return %arg0, %arg1 : i32, i32
  }
  func.func @transform_1(%arg0: i32, %arg1: i32) -> (i32, i32) {
    %c0_i32 = arith.constant 0 : i32
    %c0_i32_0 = arith.constant 0 : i32
    return %arg1, %c0_i32 : i32, i32
  }
  func.func @transform_2(%arg0: i32, %arg1: i32) -> (i32, i32) {
    %c0_i32 = arith.constant 0 : i32
    %c0_i32_0 = arith.constant 0 : i32
    return %arg0, %c0_i32 : i32, i32
  }
  func.func @transform_3(%arg0: i32, %arg1: i32) -> (i32, i32, i32) {
    %c0_i32 = arith.constant 0 : i32
    %c0_i32_0 = arith.constant 0 : i32
    %c0_i32_1 = arith.constant 0 : i32
    return %arg0, %c0_i32, %c0_i32_0 : i32, i32, i32
  }
}

module attributes {stable_mosaic.version = 11 : i64} {
  func.func @_bn_leaky_kernel(%arg0: i32, %arg1: memref<16x128xbf16, #tpu.memory_space<vmem>>, %arg2: memref<1x128xf32, #tpu.memory_space<vmem>>, %arg3: memref<1x128xf32, #tpu.memory_space<vmem>>, %arg4: memref<16x128xbf16, #tpu.memory_space<vmem>>) attributes {dimension_semantics = [#tpu.dimension_semantics<parallel>], iteration_bounds = array<i64: 2>, scalar_prefetch = 0 : i64, scratch_operands = 0 : i64, tpu.core_type = #tpu.core_type<tc>, window_params = [{transform_indices = @transform_0, window_bounds = array<i64: 16, 128>}, {pipeline_mode = #tpu.pipeline_mode<synchronous>, transform_indices = @transform_1, window_bounds = array<i64: 1, 128>}, {pipeline_mode = #tpu.pipeline_mode<synchronous>, transform_indices = @transform_2, window_bounds = array<i64: 1, 128>}, {transform_indices = @transform_3, window_bounds = array<i64: 16, 128>}]} {
    %c0 = arith.constant 0 : index
    %c0_0 = arith.constant 0 : index
    %0 = vector.load %arg1[%c0, %c0_0] : memref<16x128xbf16, #tpu.memory_space<vmem>>, vector<16x128xbf16>
    %1 = arith.extf %0 : vector<16x128xbf16> to vector<16x128xf32>
    %c0_1 = arith.constant 0 : index
    %c0_2 = arith.constant 0 : index
    %2 = vector.load %arg2[%c0_1, %c0_2] : memref<1x128xf32, #tpu.memory_space<vmem>>, vector<1x128xf32>
    %3 = vector.broadcast %2 : vector<1x128xf32> to vector<16x128xf32>
    %4 = arith.mulf %1, %3 : vector<16x128xf32>
    %c0_3 = arith.constant 0 : index
    %c0_4 = arith.constant 0 : index
    %5 = vector.load %arg3[%c0_3, %c0_4] : memref<1x128xf32, #tpu.memory_space<vmem>>, vector<1x128xf32>
    %6 = vector.broadcast %5 : vector<1x128xf32> to vector<16x128xf32>
    %7 = arith.addf %4, %6 : vector<16x128xf32>
    %cst = arith.constant 0.000000e+00 : f32
    %8 = vector.broadcast %cst : f32 to vector<16x128xf32>
    %9 = arith.cmpf oge, %7, %8 : vector<16x128xf32>
    %cst_5 = arith.constant 2.000000e-01 : f32
    %10 = vector.broadcast %cst_5 : f32 to vector<16x128xf32>
    %11 = arith.mulf %10, %7 : vector<16x128xf32>
    %12 = arith.select %9, %7, %11 : vector<16x128xi1>, vector<16x128xf32>
    %13 = arith.truncf %12 : vector<16x128xf32> to vector<16x128xbf16>
    %c0_6 = arith.constant 0 : index
    %c0_7 = arith.constant 0 : index
    %14 = vector.load %arg4[%c0_6, %c0_7] : memref<16x128xbf16, #tpu.memory_space<vmem>>, vector<16x128xbf16>
    tpu.vector_store %arg4[%c0_6, %c0_7], %13 {strides = array<i32>} : memref<16x128xbf16, #tpu.memory_space<vmem>>, vector<16x128xbf16>,
    return
  }
  func.func @transform_0(%arg0: i32) -> (i32, i32) {
    %c0_i32 = arith.constant 0 : i32
    %c0_i32_0 = arith.constant 0 : i32
    return %arg0, %c0_i32 : i32, i32
  }
  func.func @transform_1(%arg0: i32) -> (i32, i32) {
    %c0_i32 = arith.constant 0 : i32
    %c0_i32_0 = arith.constant 0 : i32
    %c0_i32_1 = arith.constant 0 : i32
    return %c0_i32, %c0_i32_0 : i32, i32
  }
  func.func @transform_2(%arg0: i32) -> (i32, i32) {
    %c0_i32 = arith.constant 0 : i32
    %c0_i32_0 = arith.constant 0 : i32
    %c0_i32_1 = arith.constant 0 : i32
    return %c0_i32, %c0_i32_0 : i32, i32
  }
  func.func @transform_3(%arg0: i32) -> (i32, i32) {
    %c0_i32 = arith.constant 0 : i32
    %c0_i32_0 = arith.constant 0 : i32
    return %arg0, %c0_i32 : i32, i32
  }
}

module attributes {stable_mosaic.version = 11 : i64} {
  func.func @_conv_act_kernel(%arg0: i32, %arg1: i32, %arg2: memref<8x256xbf16, #tpu.memory_space<vmem>>, %arg3: memref<256x128xbf16, #tpu.memory_space<vmem>>, %arg4: memref<1x128xf32, #tpu.memory_space<vmem>>, %arg5: memref<8x128xf32, #tpu.memory_space<vmem>>, %arg6: memref<8x128xf32, #tpu.memory_space<vmem>>) attributes {dimension_semantics = [#tpu.dimension_semantics<parallel>, #tpu.dimension_semantics<arbitrary>], iteration_bounds = array<i64: 1, 1>, scalar_prefetch = 0 : i64, scratch_operands = 1 : i64, tpu.core_type = #tpu.core_type<tc>, window_params = [{transform_indices = @transform_0, window_bounds = array<i64: 8, 256>}, {transform_indices = @transform_1, window_bounds = array<i64: 256, 128>}, {pipeline_mode = #tpu.pipeline_mode<synchronous>, transform_indices = @transform_2, window_bounds = array<i64: 1, 128>}, {transform_indices = @transform_3, window_bounds = array<i64: 8, 128>}]} {
    %c0_i32 = arith.constant 0 : i32
    %0 = arith.cmpi eq, %arg1, %c0_i32 : i32
    %1 = arith.extui %0 : i1 to i32
    %c0_i32_0 = arith.constant 0 : i32
    %2 = arith.cmpi ne, %1, %c0_i32_0 : i32
    scf.if %2 {
      %cst_10 = arith.constant 0.000000e+00 : f32
      %12 = vector.broadcast %cst_10 : f32 to vector<8x128xf32>
      %c0_11 = arith.constant 0 : index
      %c0_12 = arith.constant 0 : index
      %13 = vector.load %arg6[%c0_11, %c0_12] : memref<8x128xf32, #tpu.memory_space<vmem>>, vector<8x128xf32>
      tpu.vector_store %arg6[%c0_11, %c0_12], %12 {strides = array<i32>} : memref<8x128xf32, #tpu.memory_space<vmem>>, vector<8x128xf32>,
    } else {
    }
    %c0 = arith.constant 0 : index
    %c0_1 = arith.constant 0 : index
    %3 = vector.load %arg6[%c0, %c0_1] : memref<8x128xf32, #tpu.memory_space<vmem>>, vector<8x128xf32>
    %c0_2 = arith.constant 0 : index
    %c0_3 = arith.constant 0 : index
    %4 = vector.load %arg2[%c0_2, %c0_3] : memref<8x256xbf16, #tpu.memory_space<vmem>>, vector<8x256xbf16>
    %c0_4 = arith.constant 0 : index
    %c0_5 = arith.constant 0 : index
    %5 = vector.load %arg3[%c0_4, %c0_5] : memref<256x128xbf16, #tpu.memory_space<vmem>>, vector<256x128xbf16>
    %cst = arith.constant dense<0.000000e+00> : vector<8x128xf32>
    %6 = tpu.matmul %4, %5, %cst {dimension_numbers = #tpu.dot_dimension_numbers<[1], [0], [0], [1], [0, 0, 1, 1], [], []>} : vector<8x256xbf16>, vector<256x128xbf16>, vector<8x128xf32> -> vector<8x128xf32>
    %7 = arith.addf %3, %6 : vector<8x128xf32>
    %c0_6 = arith.constant 0 : index
    %c0_7 = arith.constant 0 : index
    %8 = vector.load %arg6[%c0_6, %c0_7] : memref<8x128xf32, #tpu.memory_space<vmem>>, vector<8x128xf32>
    tpu.vector_store %arg6[%c0_6, %c0_7], %7 {strides = array<i32>} : memref<8x128xf32, #tpu.memory_space<vmem>>, vector<8x128xf32>,
    %c0_i32_8 = arith.constant 0 : i32
    %9 = arith.cmpi eq, %arg1, %c0_i32_8 : i32
    %10 = arith.extui %9 : i1 to i32
    %c0_i32_9 = arith.constant 0 : i32
    %11 = arith.cmpi ne, %10, %c0_i32_9 : i32
    scf.if %11 {
      %c0_10 = arith.constant 0 : index
      %c0_11 = arith.constant 0 : index
      %12 = vector.load %arg6[%c0_10, %c0_11] : memref<8x128xf32, #tpu.memory_space<vmem>>, vector<8x128xf32>
      %c0_12 = arith.constant 0 : index
      %c0_13 = arith.constant 0 : index
      %13 = vector.load %arg4[%c0_12, %c0_13] : memref<1x128xf32, #tpu.memory_space<vmem>>, vector<1x128xf32>
      %14 = vector.broadcast %13 : vector<1x128xf32> to vector<8x128xf32>
      %15 = arith.addf %12, %14 : vector<8x128xf32>
      %16 = arith.negf %15 : vector<8x128xf32>
      %17 = math.exp %16 : vector<8x128xf32>
      %cst_14 = arith.constant 1.000000e+00 : f32
      %18 = vector.broadcast %cst_14 : f32 to vector<8x128xf32>
      %19 = arith.addf %18, %17 : vector<8x128xf32>
      %20 = arith.divf %18, %19 : vector<8x128xf32>
      %c0_15 = arith.constant 0 : index
      %c0_16 = arith.constant 0 : index
      %21 = vector.load %arg5[%c0_15, %c0_16] : memref<8x128xf32, #tpu.memory_space<vmem>>, vector<8x128xf32>
      tpu.vector_store %arg5[%c0_15, %c0_16], %20 {strides = array<i32>} : memref<8x128xf32, #tpu.memory_space<vmem>>, vector<8x128xf32>,
    } else {
    }
    return
  }
  func.func @transform_0(%arg0: i32, %arg1: i32) -> (i32, i32) {
    %c0_i32 = arith.constant 0 : i32
    return %arg0, %arg1 : i32, i32
  }
  func.func @transform_1(%arg0: i32, %arg1: i32) -> (i32, i32) {
    %c0_i32 = arith.constant 0 : i32
    %c0_i32_0 = arith.constant 0 : i32
    return %arg1, %c0_i32 : i32, i32
  }
  func.func @transform_2(%arg0: i32, %arg1: i32) -> (i32, i32) {
    %c0_i32 = arith.constant 0 : i32
    %c0_i32_0 = arith.constant 0 : i32
    %c0_i32_1 = arith.constant 0 : i32
    return %c0_i32, %c0_i32_0 : i32, i32
  }
  func.func @transform_3(%arg0: i32, %arg1: i32) -> (i32, i32) {
    %c0_i32 = arith.constant 0 : i32
    %c0_i32_0 = arith.constant 0 : i32
    return %arg0, %c0_i32 : i32, i32
  }
}

</mosaic_0001>

<llo_original>
// kernel: _lambda_.4
$region0: #{_lambda_.4}
  #allocation0 [shape = 'u32[]', space=smem, size = 0x4, offset = 0x4, fixed_abs, tag = 'smem constant byte address 0x4 - core index']
  #allocation1 [shape = 'u32[144,128]{1,0:T(1,128)}', space=vmem, size = 0x12000, scoped, tag = 'internal scratch']
  #allocation2 [shape = 'f32[64,128]{1,0:T(8,128)}', space=vmem, size = 0x8000, scoped, tag = 'scratch operand']
  %s0 = inlined_call_operand.vmem [shape: bf16[128,128], index: 0, kind: input, shape index: {}]
  %s1 = inlined_call_operand.vmem [shape: bf16[128,128], index: 1, kind: input, shape index: {}]
  %s2 = inlined_call_operand.vmem [shape: f32[1,128], index: 2, kind: input, shape index: {}]
  %s3 = inlined_call_operand.vmem [shape: bf16[128,128], index: 3, kind: output, shape index: {}]
  %s4 = sld [smem:[#allocation0]]
  $region53: #{_lambda_.4} parent=0
    _
  %s6 = ssub.s32 1, %s4
  %s7 = scalar_select 0, %s6, %s4
  loop: start=0, step=1, limit=4
  $region2: #{_lambda_.4} parent=0 // loop_pre_header
    _
  $region3: #{_lambda_.4} parent=0 // loop_header
    %s9 = sphi 0, %s13
    %p10 = scmp.ge.s32.totalorder %s9, 4
    %s16 = sphi 0, %s28
    %s17 = sphi 0, %s24
    %s18 = sphi 0, %s16
    %s19 = sphi 0, %s17
    %s20 = sphi 0, %s18
    %s21 = sphi 0, %s19
    %s33 = sphi 0, %s35
    %s36 = sphi 0, %s33
    %s37 = sphi 0, %s36
    %s53 = sphi 0, %s37
    %s59 = sphi 0, %s61
    %s62 = sphi 0, %s59
    %s63 = sphi 0, %s62
    %s79 = sphi 0, %s63
    %s83 = sphi 0, %s83
    %s85 = sphi 0, %s83
    %s86 = sphi 0, %s85
    %s100 = sphi 0, %s86
    %s106 = sphi 0, %s108
    %s109 = sphi 0, %s106
    %s110 = sphi 0, %s109
    %s126 = sphi 0, %s110
  $region4: #{_lambda_.4} parent=0 // loop_header_branch
    %12 = sbr.rel (%p10) target = $region8
  $region5: #{_lambda_.4} parent=0 // loop_body
    %s14 = ssub.s32 %s9, 1
    %s15 = ssub.s32 %s9, 2
    %s22 = sadd.s32 1, %s17
    %p23 = scmp.ge.s32.totalorder %s22, 1
    %s24 = scalar_select %p23, 0, %s22
    %s25 = sadd.s32 1, %s16
    %s26 = scalar_select %p23, %s25, %s16
    %p27 = scmp.ge.s32.totalorder %s26, 2
    %s28 = scalar_select %p27, 0, %s26
    %s29 = ssub.s32 %s16, %s28
    %s30 = ssub.s32 %s17, %s24
    %s31 = sor.u32 %s29, %s30
    %p32 = scmp.eq.s32.totalorder %s31, 0
    %s34 = sadd.s32 %s33, 1
    %s35 = scalar_select %p32, %s33, %s34
    %p38 = pneg %p32
    %p39 = scmp.eq.s32.totalorder %s9, 1
    %p40 = por %p38, %p39
    %p41 = scmp.ne.s32.totalorder %s33, %s36
    %p42 = scmp.eq.s32.totalorder %s9, 0
    %p43 = por %p41, %p42
    %p44 = scmp.ne.s32.totalorder %s33, %s36
    %p45 = scmp.eq.s32.totalorder %s14, 1
    %p46 = por %p44, %p45
    %p47 = scmp.ne.s32.totalorder %s36, %s37
    %p48 = scmp.eq.s32.totalorder %s14, 0
    %p49 = por %p47, %p48
    %p50 = scmp.ne.s32.totalorder %s36, %s37
    %p51 = scmp.eq.s32.totalorder %s15, 1
    %p52 = por %p50, %p51
    %p54 = scmp.ne.s32.totalorder %s37, %s53
    %p55 = scmp.eq.s32.totalorder %s15, 0
    %p56 = por %p54, %p55
    %s57 = ssub.s32 %s17, %s24
    %p58 = scmp.eq.s32.totalorder %s57, 0
    %s60 = sadd.s32 %s59, 1
    %s61 = scalar_select %p58, %s59, %s60
    %p64 = pneg %p58
    %p65 = scmp.eq.s32.totalorder %s9, 1
    %p66 = por %p64, %p65
    %p67 = scmp.ne.s32.totalorder %s59, %s62
    %p68 = scmp.eq.s32.totalorder %s9, 0
    %p69 = por %p67, %p68
    %p70 = scmp.ne.s32.totalorder %s59, %s62
    %p71 = scmp.eq.s32.totalorder %s14, 1
    %p72 = por %p70, %p71
    %p73 = scmp.ne.s32.totalorder %s62, %s63
    %p74 = scmp.eq.s32.totalorder %s14, 0
    %p75 = por %p73, %p74
    %p76 = scmp.ne.s32.totalorder %s62, %s63
    %p77 = scmp.eq.s32.totalorder %s15, 1
    %p78 = por %p76, %p77
    %p80 = scmp.ne.s32.totalorder %s63, %s79
    %p81 = scmp.eq.s32.totalorder %s15, 0
    %p82 = por %p80, %p81
    %s84 = sadd.s32 %s83, 1
    %p87 = scmp.eq.s32.totalorder %s9, 1
    %p88 = scmp.ne.s32.totalorder %s83, %s85
    %p89 = scmp.eq.s32.totalorder %s9, 0
    %p90 = por %p88, %p89
    %p91 = scmp.ne.s32.totalorder %s83, %s85
    %p92 = scmp.eq.s32.totalorder %s14, 1
    %p93 = por %p91, %p92
    %p94 = scmp.ne.s32.totalorder %s85, %s86
    %p95 = scmp.eq.s32.totalorder %s14, 0
    %p96 = por %p94, %p95
    %p97 = scmp.ne.s32.totalorder %s85, %s86
    %p98 = scmp.eq.s32.totalorder %s15, 1
    %p99 = por %p97, %p98
    %p101 = scmp.ne.s32.totalorder %s86, %s100
    %p102 = scmp.eq.s32.totalorder %s15, 0
    %p103 = por %p101, %p102
    %s104 = ssub.s32 %s16, %s28
    %p105 = scmp.eq.s32.totalorder %s104, 0
    %s107 = sadd.s32 %s106, 1
    %s108 = scalar_select %p105, %s106, %s107
    %p111 = pneg %p105
    %p112 = scmp.eq.s32.totalorder %s9, 1
    %p113 = por %p111, %p112
    %p114 = scmp.ne.s32.totalorder %s106, %s109
    %p115 = scmp.eq.s32.totalorder %s9, 0
    %p116 = por %p114, %p115
    %p117 = scmp.ne.s32.totalorder %s106, %s109
    %p118 = scmp.eq.s32.totalorder %s14, 1
    %p119 = por %p117, %p118
    %p120 = scmp.ne.s32.totalorder %s109, %s110
    %p121 = scmp.eq.s32.totalorder %s14, 0
    %p122 = por %p120, %p121
    %p123 = scmp.ne.s32.totalorder %s109, %s110
    %p124 = scmp.eq.s32.totalorder %s15, 1
    %p125 = por %p123, %p124
    %p127 = scmp.ne.s32.totalorder %s110, %s126
    %p128 = scmp.eq.s32.totalorder %s15, 0
    %p129 = por %p127, %p128
    %p130 = scmp.le.s32.totalorder 1, %s9
    %p131 = scmp.lt.s32.totalorder %s9, 3
    %p132 = pnand %p130, %p131
    %p133 = pneg %p132
    // Predicated region
    $region9: #{_lambda_.4} parent=5 // pred_check
      _
    $region10: #{_lambda_.4} parent=5 // pred_check_branch
      %135 = sbr.rel (%p132) target = $region12
    $region11: #{_lambda_.4} parent=5 // pred_region
      %s136 = ssub.s32 %s9, 1
      // Predicated region
      $region13: #{_lambda_.4} parent=11 // pred_check
        %p137 = pneg %p75
      $region14: #{_lambda_.4} parent=11 // pred_check_branch
        %139 = sbr.rel (%p137) target = $region16
      $region15: #{_lambda_.4} parent=11 // pred_region
        %s140 = smul.u32 16, %s19
        %p141 = scmp.lt.s32.totalorder %s140, 15
        %s142 = scalar_select %p141, %s140, 15
        %s143 = smul.addr %s142, 4
        %s144 = scalar_lea.vmem %s1, %s143
        %s145 = smul.u32 16, %s19
      $region16: #{_lambda_.4} parent=11 // pred_fallthru
        _
      // Predicated region
      $region17: #{_lambda_.4} parent=11 // pred_check
        %p146 = pneg %p96
      $region18: #{_lambda_.4} parent=11 // pred_check_branch
        %148 = sbr.rel (%p146) target = $region20
      $region19: #{_lambda_.4} parent=11 // pred_region
        _
      $region20: #{_lambda_.4} parent=11 // pred_fallthru
        _
    $region12: #{_lambda_.4} parent=5 // pred_fallthru
      _
    %p149 = scmp.lt.s32.totalorder %s9, 2
    // Predicated region
    $region21: #{_lambda_.4} parent=5 // pred_check
      %p150 = pneg %p149
    $region22: #{_lambda_.4} parent=5 // pred_check_branch
      %152 = sbr.rel (%p150) target = $region24
    $region23: #{_lambda_.4} parent=5 // pred_region
      // Predicated region
      $region25: #{_lambda_.4} parent=23 // pred_check
        %p153 = pneg %p43
      $region26: #{_lambda_.4} parent=23 // pred_check_branch
        %155 = sbr.rel (%p153) target = $region28
      $region27: #{_lambda_.4} parent=23 // pred_region
        %s156 = smul.u32 8, %s16
        %p157 = scmp.lt.s32.totalorder %s156, 15
        %s158 = scalar_select %p157, %s156, 15
        %p159 = scmp.lt.s32.totalorder %s17, 0
        %s160 = scalar_select %p159, %s17, 0
        %s161 = sadd.s32 %s160, %s158
        %s162 = smul.addr %s161, 4
        %s163 = scalar_lea.vmem %s0, %s162
        %s164 = smul.u32 8, %s16
      $region28: #{_lambda_.4} parent=23 // pred_fallthru
        _
    $region24: #{_lambda_.4} parent=5 // pred_fallthru
      _
    %p165 = scmp.le.s32.totalorder 1, %s9
    %p166 = scmp.lt.s32.totalorder %s9, 3
    %p167 = pnand %p165, %p166
    %p168 = pneg %p167
    // Predicated region
    $region29: #{_lambda_.4} parent=5 // pred_check
      _
    $region30: #{_lambda_.4} parent=5 // pred_check_branch
      %170 = sbr.rel (%p167) target = $region32
    $region31: #{_lambda_.4} parent=5 // pred_region
      %s171 = ssub.s32 %s9, 1
      %s172 = smul.u32 8, %s18
      %p173 = scmp.lt.s32.totalorder %s172, 15
      %s174 = scalar_select %p173, %s172, 15
      %p175 = scmp.lt.s32.totalorder %s19, 0
      %s176 = scalar_select %p175, %s19, 0
      %s177 = sadd.s32 %s176, %s174
      %s178 = smul.addr %s177, 4
      %s179 = scalar_lea.vmem %s0, %s178
      %p180 = pneg %p49
      %p181 = pneg %p46
      %s182 = smul.u32 16, %s19
      %p183 = scmp.lt.s32.totalorder %s182, 15
      %s184 = scalar_select %p183, %s182, 15
      %s185 = smul.addr %s184, 4
      %s186 = scalar_lea.vmem %s1, %s185
      %p187 = pneg %p75
      %p188 = pneg %p72
      %p189 = pneg %p96
      %p190 = pneg %p93
      %p191 = pneg %p122
      %p192 = pneg %p119
      %s193 = smul.u32 8, %s18
      %p194 = scmp.lt.s32.totalorder %s193, 15
      %s195 = scalar_select %p194, %s193, 15
      %s196 = smul.addr %s195, 4
      %s197 = scalar_lea.vmem %s3, %s196
      %s198 = smul.u32 8, %s18
      %p199 = scmp.lt.s32.totalorder %s198, 15
      %s200 = scalar_select %p199, %s198, 15
      %p201 = scmp.lt.s32.totalorder %s19, 0
      %s202 = scalar_select %p201, %s19, 0
      %s203 = sadd.s32 %s202, %s200
      %s204 = smul.addr %s203, 4
      %s205 = scalar_lea.vmem %s0, %s204
      %s206 = smul.u32 8, %s18
      %s207 = smul.u32 16, %s19
      %p208 = scmp.lt.s32.totalorder %s207, 15
      %s209 = scalar_select %p208, %s207, 15
      %s210 = smul.addr %s209, 4
      %s211 = scalar_lea.vmem %s1, %s210
      %s212 = smul.u32 16, %s19
      %s213 = smul.u32 8, %s18
      %p214 = scmp.lt.s32.totalorder %s213, 15
      %s215 = scalar_select %p214, %s213, 15
      %s216 = smul.addr %s215, 4
      %s217 = scalar_lea.vmem %s3, %s216
      %s218 = smul.u32 8, %s18
      %p220 = scmp.eq.s32.totalorder %s19, 0
      // Predicated region
      $region33: #{_lambda_.4} parent=31 // pred_check
        %p221 = pneg %p220
      $region34: #{_lambda_.4} parent=31 // pred_check_branch
        %223 = sbr.rel (%p221) target = $region36
      $region35: #{_lambda_.4} parent=31 // pred_region
        %224 = vst [vmem:[#allocation2] sm:$0xff] 0.0
        %225 = vst [vmem:[#allocation2 + $0x8] sm:$0xff] 0.0
        %226 = vst [vmem:[#allocation2 + $0x10] sm:$0xff] 0.0
        %227 = vst [vmem:[#allocation2 + $0x18] sm:$0xff] 0.0
        %228 = vst [vmem:[#allocation2 + $0x20] sm:$0xff] 0.0
        %229 = vst [vmem:[#allocation2 + $0x28] sm:$0xff] 0.0
        %230 = vst [vmem:[#allocation2 + $0x30] sm:$0xff] 0.0
        %231 = vst [vmem:[#allocation2 + $0x38] sm:$0xff] 0.0
      $region36: #{_lambda_.4} parent=31 // pred_fallthru
        _
      %v232 = vld [vmem:[#allocation2] sm:$0xff]
      %v233 = vld [vmem:[#allocation2 + $0x8] sm:$0xff]
      %v234 = vld [vmem:[#allocation2 + $0x10] sm:$0xff]
      %v235 = vld [vmem:[#allocation2 + $0x18] sm:$0xff]
      %v236 = vld [vmem:[#allocation2 + $0x20] sm:$0xff]
      %v237 = vld [vmem:[#allocation2 + $0x28] sm:$0xff]
      %v238 = vld [vmem:[#allocation2 + $0x30] sm:$0xff]
      %v239 = vld [vmem:[#allocation2 + $0x38] sm:$0xff]
      %v240 = vld [vmem:[%s205] sm:$0xf]
      %v241 = vld [vmem:[%s205 + $0x4] sm:$0xf]
      %v242 = vld [vmem:[%s205 + $0x8] sm:$0xf]
      %v243 = vld [vmem:[%s205 + $0xc] sm:$0xf]
      %v244 = vld [vmem:[%s205 + $0x10] sm:$0xf]
      %v245 = vld [vmem:[%s205 + $0x14] sm:$0xf]
      %v246 = vld [vmem:[%s205 + $0x18] sm:$0xf]
      %v247 = vld [vmem:[%s205 + $0x1c] sm:$0xf]
      %v248 = vld [vmem:[%s211] sm:$0xf]
      %v249 = vld [vmem:[%s211 + $0x4] sm:$0xf]
      %v250 = vld [vmem:[%s211 + $0x8] sm:$0xf]
      %v251 = vld [vmem:[%s211 + $0xc] sm:$0xf]
      %v252 = vld [vmem:[%s211 + $0x10] sm:$0xf]
      %v253 = vld [vmem:[%s211 + $0x14] sm:$0xf]
      %v254 = vld [vmem:[%s211 + $0x18] sm:$0xf]
      %v255 = vld [vmem:[%s211 + $0x1c] sm:$0xf]
      %v256 = vld [vmem:[%s211 + $0x20] sm:$0xf]
      %v257 = vld [vmem:[%s211 + $0x24] sm:$0xf]
      %v258 = vld [vmem:[%s211 + $0x28] sm:$0xf]
      %v259 = vld [vmem:[%s211 + $0x2c] sm:$0xf]
      %v260 = vld [vmem:[%s211 + $0x30] sm:$0xf]
      %v261 = vld [vmem:[%s211 + $0x34] sm:$0xf]
      %v262 = vld [vmem:[%s211 + $0x38] sm:$0xf]
      %v263 = vld [vmem:[%s211 + $0x3c] sm:$0xf]
      %v272 = vunpack.c.l.b16 %v240
      %v273 = vunpack.c.l.b16 %v241
      %v274 = vunpack.c.l.b16 %v242
      %v275 = vunpack.c.l.b16 %v243
      %v276 = vunpack.c.l.b16 %v244
      %v277 = vunpack.c.l.b16 %v245
      %v278 = vunpack.c.l.b16 %v246
      %v279 = vunpack.c.l.b16 %v247
      %v280 = vpack.c.b16 %v273, %v272
      %v281 = vpack.c.b16 %v275, %v274
      %v282 = vpack.c.b16 %v277, %v276
      %v283 = vpack.c.b16 %v279, %v278
      %v304 = vunpack.c.l.b16 %v248
      %v305 = vunpack.c.l.b16 %v249
      %v306 = vunpack.c.l.b16 %v250
      %v307 = vunpack.c.l.b16 %v251
      %v308 = vunpack.c.l.b16 %v252
      %v309 = vunpack.c.l.b16 %v253
      %v310 = vunpack.c.l.b16 %v254
      %v311 = vunpack.c.l.b16 %v255
      %v312 = vunpack.c.l.b16 %v256
      %v313 = vunpack.c.l.b16 %v257
      %v314 = vunpack.c.l.b16 %v258
      %v315 = vunpack.c.l.b16 %v259
      %v316 = vunpack.c.l.b16 %v260
      %v317 = vunpack.c.l.b16 %v261
      %v318 = vunpack.c.l.b16 %v262
      %v319 = vunpack.c.l.b16 %v263
      %v320 = vpack.c.b16 %v305, %v304
      %v321 = vpack.c.b16 %v307, %v306
      %v322 = vpack.c.b16 %v309, %v308
      %v323 = vpack.c.b16 %v311, %v310
      %v324 = vpack.c.b16 %v313, %v312
      %v325 = vpack.c.b16 %v315, %v314
      %v326 = vpack.c.b16 %v317, %v316
      %v327 = vpack.c.b16 %v319, %v318
      %336 = vmatprep.subr.bf16.mxu0 0
      %337 = vmatpush1.bf16.msra.mxu0 %v327
      %338 = vmatprep.subr.bf16.mxu0 0
      %339 = vmatpush1.bf16.msra.mxu0 %v326
      %340 = vmatprep.subr.bf16.mxu0 0
      %341 = vmatpush1.bf16.msra.mxu0 %v325
      %342 = vmatprep.subr.bf16.mxu0 0
      %343 = vmatpush1.bf16.msra.mxu0 %v324
      %344 = vmatprep.subr.bf16.mxu0 0
      %345 = vmatpush1.bf16.msra.mxu0 %v323
      %346 = vmatprep.subr.bf16.mxu0 0
      %347 = vmatpush1.bf16.msra.mxu0 %v322
      %348 = vmatprep.subr.bf16.mxu0 0
      %349 = vmatpush1.bf16.msra.mxu0 %v321
      %350 = vmatprep.subr.bf16.mxu0 0
      %351 = vmatpush1.bf16.msra.mxu0 %v320
      %352 = vmatprep.subr.bf16.mxu0 0
      %353 = vmatpush2.bf16.msra.mxu0 0
      %354 = vmatprep.subr.bf16.mxu0 0
      %355 = vmatpush2.bf16.msra.mxu0 0
      %356 = vmatprep.subr.bf16.mxu0 0
      %357 = vmatpush2.bf16.msra.mxu0 0
      %358 = vmatprep.subr.bf16.mxu0 0
      %359 = vmatpush2.bf16.msra.mxu0 0
      %360 = vmatprep.subr.bf16.mxu0 0
      %361 = vmatpush2.bf16.msra.mxu0 0
      %362 = vmatprep.subr.bf16.mxu0 0
      %363 = vmatpush2.bf16.msra.mxu0 0
      %364 = vmatprep.subr.bf16.mxu0 0
      %365 = vmatpush2.bf16.msra.mxu0 0
      %366 = vmatprep.subr.bf16.mxu0 0
      %367 = vmatpush2.bf16.msra.mxu0 0
      %368 = vmatprep.mubr.bf16.mxu0 0
      %369 = vmatmul.mubr.bf16.gmra.mxu0 %v280
      %v370 = vpop.f32.mrf.mxu0
      %v371 = vadd.f32 0.0, %v370
      %v372 = vpop.f32.mrf.mxu0
      %v373 = vpop.f32.mrf.mxu0
      %v374 = vadd.f32 0.0, %v373
      %v375 = vpop.f32.mrf.mxu0
      %376 = vmatprep.mubr.bf16.mxu0 0
      %377 = vmatmul.mubr.bf16.gmra.mxu0 %v281
      %v378 = vpop.f32.mrf.mxu0
      %v379 = vadd.f32 0.0, %v378
      %v380 = vpop.f32.mrf.mxu0
      %v381 = vpop.f32.mrf.mxu0
      %v382 = vadd.f32 0.0, %v381
      %v383 = vpop.f32.mrf.mxu0
      %384 = vmatprep.mubr.bf16.mxu0 0
      %385 = vmatmul.mubr.bf16.gmra.mxu0 %v282
      %v386 = vpop.f32.mrf.mxu0
      %v387 = vadd.f32 0.0, %v386
      %v388 = vpop.f32.mrf.mxu0
      %v389 = vpop.f32.mrf.mxu0
      %v390 = vadd.f32 0.0, %v389
      %v391 = vpop.f32.mrf.mxu0
      %392 = vmatprep.mubr.bf16.mxu0 0
      %393 = vmatmul.mubr.bf16.gmra.mxu0 %v283
      %v394 = vpop.f32.mrf.mxu0
      %v395 = vadd.f32 0.0, %v394
      %v396 = vpop.f32.mrf.mxu0
      %v397 = vpop.f32.mrf.mxu0
      %v398 = vadd.f32 0.0, %v397
      %v399 = vpop.f32.mrf.mxu0
      %400 = vdwg.mxu0
      %v401 = vadd.f32 %v232, %v371
      %v402 = vadd.f32 %v233, %v374
      %v403 = vadd.f32 %v234, %v379
      %v404 = vadd.f32 %v235, %v382
      %v405 = vadd.f32 %v236, %v387
      %v406 = vadd.f32 %v237, %v390
      %v407 = vadd.f32 %v238, %v395
      %v408 = vadd.f32 %v239, %v398
      %409 = vst [vmem:[#allocation2] sm:$0xff] %v401
      %410 = vst [vmem:[#allocation2 + $0x8] sm:$0xff] %v402
      %411 = vst [vmem:[#allocation2 + $0x10] sm:$0xff] %v403
      %412 = vst [vmem:[#allocation2 + $0x18] sm:$0xff] %v404
      %413 = vst [vmem:[#allocation2 + $0x20] sm:$0xff] %v405
      %414 = vst [vmem:[#allocation2 + $0x28] sm:$0xff] %v406
      %415 = vst [vmem:[#allocation2 + $0x30] sm:$0xff] %v407
      %416 = vst [vmem:[#allocation2 + $0x38] sm:$0xff] %v408
      // Predicated region
      $region37: #{_lambda_.4} parent=31 // pred_check
        %p417 = pneg %p220
      $region38: #{_lambda_.4} parent=31 // pred_check_branch
        %419 = sbr.rel (%p417) target = $region40
      $region39: #{_lambda_.4} parent=31 // pred_region
        %v420 = vld [vmem:[#allocation2] sm:$0xff]
        %v421 = vld [vmem:[#allocation2 + $0x8] sm:$0xff]
        %v422 = vld [vmem:[#allocation2 + $0x10] sm:$0xff]
        %v423 = vld [vmem:[#allocation2 + $0x18] sm:$0xff]
        %v424 = vld [vmem:[#allocation2 + $0x20] sm:$0xff]
        %v425 = vld [vmem:[#allocation2 + $0x28] sm:$0xff]
        %v426 = vld [vmem:[#allocation2 + $0x30] sm:$0xff]
        %v427 = vld [vmem:[#allocation2 + $0x38] sm:$0xff]
        %v428 = vld [vmem:[%s2] sm:$0x1]
        %v430 = vlaneseq
        %v431 = vshrl.u32 %v430, 7
        %v432 = vsub.s32 0, %v431
        %v433 = vrot.slane %v428, %v432
        %v435 = vadd.f32 %v420, %v433
        %v436 = vadd.f32 %v421, %v433
        %v437 = vadd.f32 %v422, %v433
        %v438 = vadd.f32 %v423, %v433
        %v439 = vadd.f32 %v424, %v433
        %v440 = vadd.f32 %v425, %v433
        %v441 = vadd.f32 %v426, %v433
        %v442 = vadd.f32 %v427, %v433
        %vm443 = vcmp.ge.f32.partialorder %v435, 0.0
        %vm444 = vcmp.ge.f32.partialorder %v436, 0.0
        %vm445 = vcmp.ge.f32.partialorder %v437, 0.0
        %vm446 = vcmp.ge.f32.partialorder %v438, 0.0
        %vm447 = vcmp.ge.f32.partialorder %v439, 0.0
        %vm448 = vcmp.ge.f32.partialorder %v440, 0.0
        %vm449 = vcmp.ge.f32.partialorder %v441, 0.0
        %vm450 = vcmp.ge.f32.partialorder %v442, 0.0
        %v451 = vmul.f32 %v435, 0.2
        %v452 = vmul.f32 %v436, 0.2
        %v453 = vmul.f32 %v437, 0.2
        %v454 = vmul.f32 %v438, 0.2
        %v455 = vmul.f32 %v439, 0.2
        %v456 = vmul.f32 %v440, 0.2
        %v457 = vmul.f32 %v441, 0.2
        %v458 = vmul.f32 %v442, 0.2
        %v459 = vsel %vm443, %v435, %v451
        %v460 = vsel %vm444, %v436, %v452
        %v461 = vsel %vm445, %v437, %v453
        %v462 = vsel %vm446, %v438, %v454
        %v463 = vsel %vm447, %v439, %v455
        %v464 = vsel %vm448, %v440, %v456
        %v465 = vsel %vm449, %v441, %v457
        %v466 = vsel %vm450, %v442, %v458
        %v467 = vpack.c.bf16 %v460, %v459
        %v468 = vpack.c.bf16 %v462, %v461
        %v469 = vpack.c.bf16 %v464, %v463
        %v470 = vpack.c.bf16 %v466, %v465
        %v475 = vunpack.c.l.b16 %v467
        %v476 = vunpack.c.h.b16 %v467
        %v477 = vunpack.c.l.b16 %v468
        %v478 = vunpack.c.h.b16 %v468
        %v479 = vunpack.c.l.b16 %v469
        %v480 = vunpack.c.h.b16 %v469
        %v481 = vunpack.c.l.b16 %v470
        %v482 = vunpack.c.h.b16 %v470
        %v483 = vpack.c.b16 %v475, %v475
        %v484 = vpack.c.b16 %v476, %v476
        %v485 = vpack.c.b16 %v477, %v477
        %v486 = vpack.c.b16 %v478, %v478
        %v487 = vpack.c.b16 %v479, %v479
        %v488 = vpack.c.b16 %v480, %v480
        %v489 = vpack.c.b16 %v481, %v481
        %v490 = vpack.c.b16 %v482, %v482
        %499 = vst [vmem:[%s217] sm:$0xf] %v483
        %500 = vst [vmem:[%s217 + $0x4] sm:$0xf] %v484
        %501 = vst [vmem:[%s217 + $0x8] sm:$0xf] %v485
        %502 = vst [vmem:[%s217 + $0xc] sm:$0xf] %v486
        %503 = vst [vmem:[%s217 + $0x10] sm:$0xf] %v487
        %504 = vst [vmem:[%s217 + $0x14] sm:$0xf] %v488
        %505 = vst [vmem:[%s217 + $0x18] sm:$0xf] %v489
        %506 = vst [vmem:[%s217 + $0x1c] sm:$0xf] %v490
      $region40: #{_lambda_.4} parent=31 // pred_fallthru
        _
      %s507 = smul.u32 8, %s18
      %p508 = scmp.lt.s32.totalorder %s507, 15
      %s509 = scalar_select %p508, %s507, 15
      %s510 = smul.addr %s509, 4
      %s511 = scalar_lea.vmem %s3, %s510
      // Predicated region
      $region41: #{_lambda_.4} parent=31 // pred_check
        %p512 = pneg %p119
      $region42: #{_lambda_.4} parent=31 // pred_check_branch
        %514 = sbr.rel (%p512) target = $region44
      $region43: #{_lambda_.4} parent=31 // pred_region
        %s515 = smul.u32 8, %s18
      $region44: #{_lambda_.4} parent=31 // pred_fallthru
        _
    $region32: #{_lambda_.4} parent=5 // pred_fallthru
      _
    %p516 = scmp.le.s32.totalorder 2, %s9
    // Predicated region
    $region45: #{_lambda_.4} parent=5 // pred_check
      %p517 = pneg %p516
    $region46: #{_lambda_.4} parent=5 // pred_check_branch
      %519 = sbr.rel (%p517) target = $region48
    $region47: #{_lambda_.4} parent=5 // pred_region
      %s520 = ssub.s32 %s9, 2
      // Predicated region
      $region49: #{_lambda_.4} parent=47 // pred_check
        %p521 = pneg %p125
      $region50: #{_lambda_.4} parent=47 // pred_check_branch
        %523 = sbr.rel (%p521) target = $region52
      $region51: #{_lambda_.4} parent=47 // pred_region
        %s524 = smul.u32 8, %s20
        %p525 = scmp.lt.s32.totalorder %s524, 15
        %s526 = scalar_select %p525, %s524, 15
        %s527 = smul.addr %s526, 4
        %s528 = scalar_lea.vmem %s3, %s527
      $region52: #{_lambda_.4} parent=47 // pred_fallthru
        _
    $region48: #{_lambda_.4} parent=5 // pred_fallthru
      _
  $region6: #{_lambda_.4} parent=0 // loop_footer
    %s13 = sadd.s32 1, %s9
  $region7: #{_lambda_.4} parent=0 // loop_footer_branch
    %8 = sbr.rel target = $region3
  $region8: #{_lambda_.4} parent=0 // loop_exit
    _

// kernel: _lambda_.5
$region0: #{_lambda_.5}
  #allocation0 [shape = 'u32[]', space=smem, size = 0x4, offset = 0x4, fixed_abs, tag = 'smem constant byte address 0x4 - core index']
  #allocation1 [shape = 'u32[144,128]{1,0:T(1,128)}', space=vmem, size = 0x12000, scoped, tag = 'internal scratch']
  #allocation2 [shape = 'f32[16,128]{1,0:T(8,128)}', space=vmem, size = 0x2000, scoped, tag = 'scratch operand']
  %s0 = inlined_call_operand.vmem [shape: bf16[32,128], index: 0, kind: input, shape index: {}]
  %s1 = inlined_call_operand.vmem [shape: bf16[128,128], index: 1, kind: input, shape index: {}]
  %s2 = inlined_call_operand.vmem [shape: bf16[32,128], index: 2, kind: output, shape index: {0}]
  %s3 = inlined_call_operand.vmem [shape: f32[2,8,128], index: 3, kind: output, shape index: {1}]
  %4 = xla_tuple %s2, %s3
  %s5 = sld [smem:[#allocation0]]
  $region57: #{_lambda_.5} parent=0
    _
  %s7 = ssub.s32 1, %s5
  %s8 = scalar_select 0, %s7, %s5
  loop: start=0, step=1, limit=4
  $region2: #{_lambda_.5} parent=0 // loop_pre_header
    _
  $region3: #{_lambda_.5} parent=0 // loop_header
    %s10 = sphi 0, %s14
    %p11 = scmp.ge.s32.totalorder %s10, 4
    %s17 = sphi 0, %s29
    %s18 = sphi 0, %s25
    %s19 = sphi 0, %s17
    %s20 = sphi 0, %s18
    %s21 = sphi 0, %s19
    %s22 = sphi 0, %s20
    %s34 = sphi 0, %s36
    %s37 = sphi 0, %s34
    %s38 = sphi 0, %s37
    %s54 = sphi 0, %s38
    %s60 = sphi 0, %s62
    %s63 = sphi 0, %s60
    %s64 = sphi 0, %s63
    %s80 = sphi 0, %s64
    %s86 = sphi 0, %s88
    %s89 = sphi 0, %s86
    %s90 = sphi 0, %s89
    %s106 = sphi 0, %s90
    %s112 = sphi 0, %s114
    %s115 = sphi 0, %s112
    %s116 = sphi 0, %s115
    %s132 = sphi 0, %s116
  $region4: #{_lambda_.5} parent=0 // loop_header_branch
    %13 = sbr.rel (%p11) target = $region8
  $region5: #{_lambda_.5} parent=0 // loop_body
    %s15 = ssub.s32 %s10, 1
    %s16 = ssub.s32 %s10, 2
    %s23 = sadd.s32 1, %s18
    %p24 = scmp.ge.s32.totalorder %s23, 1
    %s25 = scalar_select %p24, 0, %s23
    %s26 = sadd.s32 1, %s17
    %s27 = scalar_select %p24, %s26, %s17
    %p28 = scmp.ge.s32.totalorder %s27, 2
    %s29 = scalar_select %p28, 0, %s27
    %s30 = ssub.s32 %s17, %s29
    %s31 = ssub.s32 %s18, %s25
    %s32 = sor.u32 %s30, %s31
    %p33 = scmp.eq.s32.totalorder %s32, 0
    %s35 = sadd.s32 %s34, 1
    %s36 = scalar_select %p33, %s34, %s35
    %p39 = pneg %p33
    %p40 = scmp.eq.s32.totalorder %s10, 1
    %p41 = por %p39, %p40
    %p42 = scmp.ne.s32.totalorder %s34, %s37
    %p43 = scmp.eq.s32.totalorder %s10, 0
    %p44 = por %p42, %p43
    %p45 = scmp.ne.s32.totalorder %s34, %s37
    %p46 = scmp.eq.s32.totalorder %s15, 1
    %p47 = por %p45, %p46
    %p48 = scmp.ne.s32.totalorder %s37, %s38
    %p49 = scmp.eq.s32.totalorder %s15, 0
    %p50 = por %p48, %p49
    %p51 = scmp.ne.s32.totalorder %s37, %s38
    %p52 = scmp.eq.s32.totalorder %s16, 1
    %p53 = por %p51, %p52
    %p55 = scmp.ne.s32.totalorder %s38, %s54
    %p56 = scmp.eq.s32.totalorder %s16, 0
    %p57 = por %p55, %p56
    %s58 = ssub.s32 %s18, %s25
    %p59 = scmp.eq.s32.totalorder %s58, 0
    %s61 = sadd.s32 %s60, 1
    %s62 = scalar_select %p59, %s60, %s61
    %p65 = pneg %p59
    %p66 = scmp.eq.s32.totalorder %s10, 1
    %p67 = por %p65, %p66
    %p68 = scmp.ne.s32.totalorder %s60, %s63
    %p69 = scmp.eq.s32.totalorder %s10, 0
    %p70 = por %p68, %p69
    %p71 = scmp.ne.s32.totalorder %s60, %s63
    %p72 = scmp.eq.s32.totalorder %s15, 1
    %p73 = por %p71, %p72
    %p74 = scmp.ne.s32.totalorder %s63, %s64
    %p75 = scmp.eq.s32.totalorder %s15, 0
    %p76 = por %p74, %p75
    %p77 = scmp.ne.s32.totalorder %s63, %s64
    %p78 = scmp.eq.s32.totalorder %s16, 1
    %p79 = por %p77, %p78
    %p81 = scmp.ne.s32.totalorder %s64, %s80
    %p82 = scmp.eq.s32.totalorder %s16, 0
    %p83 = por %p81, %p82
    %s84 = ssub.s32 %s17, %s29
    %p85 = scmp.eq.s32.totalorder %s84, 0
    %s87 = sadd.s32 %s86, 1
    %s88 = scalar_select %p85, %s86, %s87
    %p91 = pneg %p85
    %p92 = scmp.eq.s32.totalorder %s10, 1
    %p93 = por %p91, %p92
    %p94 = scmp.ne.s32.totalorder %s86, %s89
    %p95 = scmp.eq.s32.totalorder %s10, 0
    %p96 = por %p94, %p95
    %p97 = scmp.ne.s32.totalorder %s86, %s89
    %p98 = scmp.eq.s32.totalorder %s15, 1
    %p99 = por %p97, %p98
    %p100 = scmp.ne.s32.totalorder %s89, %s90
    %p101 = scmp.eq.s32.totalorder %s15, 0
    %p102 = por %p100, %p101
    %p103 = scmp.ne.s32.totalorder %s89, %s90
    %p104 = scmp.eq.s32.totalorder %s16, 1
    %p105 = por %p103, %p104
    %p107 = scmp.ne.s32.totalorder %s90, %s106
    %p108 = scmp.eq.s32.totalorder %s16, 0
    %p109 = por %p107, %p108
    %s110 = ssub.s32 %s17, %s29
    %p111 = scmp.eq.s32.totalorder %s110, 0
    %s113 = sadd.s32 %s112, 1
    %s114 = scalar_select %p111, %s112, %s113
    %p117 = pneg %p111
    %p118 = scmp.eq.s32.totalorder %s10, 1
    %p119 = por %p117, %p118
    %p120 = scmp.ne.s32.totalorder %s112, %s115
    %p121 = scmp.eq.s32.totalorder %s10, 0
    %p122 = por %p120, %p121
    %p123 = scmp.ne.s32.totalorder %s112, %s115
    %p124 = scmp.eq.s32.totalorder %s15, 1
    %p125 = por %p123, %p124
    %p126 = scmp.ne.s32.totalorder %s115, %s116
    %p127 = scmp.eq.s32.totalorder %s15, 0
    %p128 = por %p126, %p127
    %p129 = scmp.ne.s32.totalorder %s115, %s116
    %p130 = scmp.eq.s32.totalorder %s16, 1
    %p131 = por %p129, %p130
    %p133 = scmp.ne.s32.totalorder %s116, %s132
    %p134 = scmp.eq.s32.totalorder %s16, 0
    %p135 = por %p133, %p134
    %p136 = scmp.le.s32.totalorder 1, %s10
    %p137 = scmp.lt.s32.totalorder %s10, 3
    %p138 = pnand %p136, %p137
    %p139 = pneg %p138
    // Predicated region
    $region9: #{_lambda_.5} parent=5 // pred_check
      _
    $region10: #{_lambda_.5} parent=5 // pred_check_branch
      %141 = sbr.rel (%p138) target = $region12
    $region11: #{_lambda_.5} parent=5 // pred_region
      %s142 = ssub.s32 %s10, 1
      // Predicated region
      $region13: #{_lambda_.5} parent=11 // pred_check
        %p143 = pneg %p76
      $region14: #{_lambda_.5} parent=11 // pred_check_branch
        %145 = sbr.rel (%p143) target = $region16
      $region15: #{_lambda_.5} parent=11 // pred_region
        %s146 = smul.u32 16, %s20
        %p147 = scmp.lt.s32.totalorder %s146, 15
        %s148 = scalar_select %p147, %s146, 15
        %s149 = smul.addr %s148, 4
        %s150 = scalar_lea.vmem %s1, %s149
        %s151 = smul.u32 16, %s20
      $region16: #{_lambda_.5} parent=11 // pred_fallthru
        _
    $region12: #{_lambda_.5} parent=5 // pred_fallthru
      _
    %p152 = scmp.lt.s32.totalorder %s10, 2
    // Predicated region
    $region17: #{_lambda_.5} parent=5 // pred_check
      %p153 = pneg %p152
    $region18: #{_lambda_.5} parent=5 // pred_check_branch
      %155 = sbr.rel (%p153) target = $region20
    $region19: #{_lambda_.5} parent=5 // pred_region
      // Predicated region
      $region21: #{_lambda_.5} parent=19 // pred_check
        %p156 = pneg %p44
      $region22: #{_lambda_.5} parent=19 // pred_check_branch
        %158 = sbr.rel (%p156) target = $region24
      $region23: #{_lambda_.5} parent=19 // pred_region
        %s159 = smul.u32 2, %s17
        %p160 = scmp.lt.s32.totalorder %s159, 3
        %s161 = scalar_select %p160, %s159, 3
        %p162 = scmp.lt.s32.totalorder %s18, 0
        %s163 = scalar_select %p162, %s18, 0
        %s164 = sadd.s32 %s163, %s161
        %s165 = smul.addr %s164, 4
        %s166 = scalar_lea.vmem %s0, %s165
        %s167 = smul.u32 2, %s17
      $region24: #{_lambda_.5} parent=19 // pred_fallthru
        _
    $region20: #{_lambda_.5} parent=5 // pred_fallthru
      _
    %p168 = scmp.le.s32.totalorder 1, %s10
    %p169 = scmp.lt.s32.totalorder %s10, 3
    %p170 = pnand %p168, %p169
    %p171 = pneg %p170
    // Predicated region
    $region25: #{_lambda_.5} parent=5 // pred_check
      _
    $region26: #{_lambda_.5} parent=5 // pred_check_branch
      %173 = sbr.rel (%p170) target = $region28
    $region27: #{_lambda_.5} parent=5 // pred_region
      %s174 = ssub.s32 %s10, 1
      %s175 = smul.u32 2, %s19
      %p176 = scmp.lt.s32.totalorder %s175, 3
      %s177 = scalar_select %p176, %s175, 3
      %p178 = scmp.lt.s32.totalorder %s20, 0
      %s179 = scalar_select %p178, %s20, 0
      %s180 = sadd.s32 %s179, %s177
      %s181 = smul.addr %s180, 4
      %s182 = scalar_lea.vmem %s0, %s181
      %p183 = pneg %p50
      %p184 = pneg %p47
      %s185 = smul.u32 16, %s20
      %p186 = scmp.lt.s32.totalorder %s185, 15
      %s187 = scalar_select %p186, %s185, 15
      %s188 = smul.addr %s187, 4
      %s189 = scalar_lea.vmem %s1, %s188
      %p190 = pneg %p76
      %p191 = pneg %p73
      %p192 = pneg %p102
      %p193 = pneg %p99
      %s194 = smul.u32 2, %s19
      %p195 = scmp.lt.s32.totalorder %s194, 3
      %s196 = scalar_select %p195, %s194, 3
      %s197 = smul.addr %s196, 4
      %s198 = scalar_lea.vmem %s2, %s197
      %p199 = pneg %p128
      %p200 = pneg %p125
      %p201 = scmp.lt.s32.totalorder %s19, 1
      %s202 = scalar_select %p201, %s19, 1
      %s203 = smul.addr %s202, 8
      %s204 = scalar_lea.vmem %s3, %s203
      %s205 = smul.u32 2, %s19
      %p206 = scmp.lt.s32.totalorder %s205, 3
      %s207 = scalar_select %p206, %s205, 3
      %p208 = scmp.lt.s32.totalorder %s20, 0
      %s209 = scalar_select %p208, %s20, 0
      %s210 = sadd.s32 %s209, %s207
      %s211 = smul.addr %s210, 4
      %s212 = scalar_lea.vmem %s0, %s211
      %s213 = smul.u32 2, %s19
      %s214 = smul.u32 16, %s20
      %p215 = scmp.lt.s32.totalorder %s214, 15
      %s216 = scalar_select %p215, %s214, 15
      %s217 = smul.addr %s216, 4
      %s218 = scalar_lea.vmem %s1, %s217
      %s219 = smul.u32 16, %s20
      %s220 = smul.u32 2, %s19
      %p221 = scmp.lt.s32.totalorder %s220, 3
      %s222 = scalar_select %p221, %s220, 3
      %s223 = smul.addr %s222, 4
      %s224 = scalar_lea.vmem %s2, %s223
      %s225 = smul.u32 2, %s19
      %p226 = scmp.lt.s32.totalorder %s19, 1
      %s227 = scalar_select %p226, %s19, 1
      %s228 = smul.addr %s227, 8
      %s229 = scalar_lea.vmem %s3, %s228
      %p231 = scmp.eq.s32.totalorder %s20, 0
      // Predicated region
      $region29: #{_lambda_.5} parent=27 // pred_check
        %p232 = pneg %p231
      $region30: #{_lambda_.5} parent=27 // pred_check_branch
        %234 = sbr.rel (%p232) target = $region32
      $region31: #{_lambda_.5} parent=27 // pred_region
        %235 = vst [vmem:[#allocation2] sm:$0xff] 0.0
        %236 = vst [vmem:[#allocation2 + $0x8] sm:$0xff] 0.0
      $region32: #{_lambda_.5} parent=27 // pred_fallthru
        _
      %v237 = vld [vmem:[#allocation2] sm:$0xff]
      %v238 = vld [vmem:[#allocation2 + $0x8] sm:$0xff]
      %v239 = vld [vmem:[%s212] sm:$0xf]
      %v240 = vld [vmem:[%s212 + $0x4] sm:$0xf]
      %v241 = vld [vmem:[%s218] sm:$0xf]
      %v242 = vld [vmem:[%s218 + $0x4] sm:$0xf]
      %v243 = vld [vmem:[%s218 + $0x8] sm:$0xf]
      %v244 = vld [vmem:[%s218 + $0xc] sm:$0xf]
      %v245 = vld [vmem:[%s218 + $0x10] sm:$0xf]
      %v246 = vld [vmem:[%s218 + $0x14] sm:$0xf]
      %v247 = vld [vmem:[%s218 + $0x18] sm:$0xf]
      %v248 = vld [vmem:[%s218 + $0x1c] sm:$0xf]
      %v249 = vld [vmem:[%s218 + $0x20] sm:$0xf]
      %v250 = vld [vmem:[%s218 + $0x24] sm:$0xf]
      %v251 = vld [vmem:[%s218 + $0x28] sm:$0xf]
      %v252 = vld [vmem:[%s218 + $0x2c] sm:$0xf]
      %v253 = vld [vmem:[%s218 + $0x30] sm:$0xf]
      %v254 = vld [vmem:[%s218 + $0x34] sm:$0xf]
      %v255 = vld [vmem:[%s218 + $0x38] sm:$0xf]
      %v256 = vld [vmem:[%s218 + $0x3c] sm:$0xf]
      %v259 = vunpack.c.l.b16 %v239
      %v260 = vunpack.c.l.b16 %v240
      %v261 = vpack.c.b16 %v260, %v259
      %v279 = vunpack.c.l.b16 %v241
      %v280 = vunpack.c.l.b16 %v242
      %v281 = vunpack.c.l.b16 %v243
      %v282 = vunpack.c.l.b16 %v244
      %v283 = vunpack.c.l.b16 %v245
      %v284 = vunpack.c.l.b16 %v246
      %v285 = vunpack.c.l.b16 %v247
      %v286 = vunpack.c.l.b16 %v248
      %v287 = vunpack.c.l.b16 %v249
      %v288 = vunpack.c.l.b16 %v250
      %v289 = vunpack.c.l.b16 %v251
      %v290 = vunpack.c.l.b16 %v252
      %v291 = vunpack.c.l.b16 %v253
      %v292 = vunpack.c.l.b16 %v254
      %v293 = vunpack.c.l.b16 %v255
      %v294 = vunpack.c.l.b16 %v256
      %v295 = vpack.c.b16 %v280, %v279
      %v296 = vpack.c.b16 %v282, %v281
      %v297 = vpack.c.b16 %v284, %v283
      %v298 = vpack.c.b16 %v286, %v285
      %v299 = vpack.c.b16 %v288, %v287
      %v300 = vpack.c.b16 %v290, %v289
      %v301 = vpack.c.b16 %v292, %v291
      %v302 = vpack.c.b16 %v294, %v293
      %311 = vmatprep.subr.bf16.mxu0 0
      %312 = vmatpush1.bf16.msra.mxu0 %v302
      %313 = vmatprep.subr.bf16.mxu0 0
      %314 = vmatpush1.bf16.msra.mxu0 %v301
      %315 = vmatprep.subr.bf16.mxu0 0
      %316 = vmatpush1.bf16.msra.mxu0 %v300
      %317 = vmatprep.subr.bf16.mxu0 0
      %318 = vmatpush1.bf16.msra.mxu0 %v299
      %319 = vmatprep.subr.bf16.mxu0 0
      %320 = vmatpush1.bf16.msra.mxu0 %v298
      %321 = vmatprep.subr.bf16.mxu0 0
      %322 = vmatpush1.bf16.msra.mxu0 %v297
      %323 = vmatprep.subr.bf16.mxu0 0
      %324 = vmatpush1.bf16.msra.mxu0 %v296
      %325 = vmatprep.subr.bf16.mxu0 0
      %326 = vmatpush1.bf16.msra.mxu0 %v295
      %327 = vmatprep.subr.bf16.mxu0 0
      %328 = vmatpush2.bf16.msra.mxu0 0
      %329 = vmatprep.subr.bf16.mxu0 0
      %330 = vmatpush2.bf16.msra.mxu0 0
      %331 = vmatprep.subr.bf16.mxu0 0
      %332 = vmatpush2.bf16.msra.mxu0 0
      %333 = vmatprep.subr.bf16.mxu0 0
      %334 = vmatpush2.bf16.msra.mxu0 0
      %335 = vmatprep.subr.bf16.mxu0 0
      %336 = vmatpush2.bf16.msra.mxu0 0
      %337 = vmatprep.subr.bf16.mxu0 0
      %338 = vmatpush2.bf16.msra.mxu0 0
      %339 = vmatprep.subr.bf16.mxu0 0
      %340 = vmatpush2.bf16.msra.mxu0 0
      %341 = vmatprep.subr.bf16.mxu0 0
      %342 = vmatpush2.bf16.msra.mxu0 0
      %343 = vmatprep.mubr.bf16.mxu0 0
      %344 = vmatmul.mubr.bf16.gmra.mxu0 %v261
      %v345 = vpop.f32.mrf.mxu0
      %v346 = vadd.f32 0.0, %v345
      %v347 = vpop.f32.mrf.mxu0
      %v348 = vpop.f32.mrf.mxu0
      %v349 = vadd.f32 0.0, %v348
      %v350 = vpop.f32.mrf.mxu0
      %351 = vdwg.mxu0
      %v352 = vadd.f32 %v237, %v346
      %v353 = vadd.f32 %v238, %v349
      %354 = vst [vmem:[#allocation2] sm:$0xff] %v352
      %355 = vst [vmem:[#allocation2 + $0x8] sm:$0xff] %v353
      // Predicated region
      $region33: #{_lambda_.5} parent=27 // pred_check
        %p356 = pneg %p231
      $region34: #{_lambda_.5} parent=27 // pred_check_branch
        %358 = sbr.rel (%p356) target = $region36
      $region35: #{_lambda_.5} parent=27 // pred_region
        %v359 = vld [vmem:[#allocation2] sm:$0xff]
        %v360 = vld [vmem:[#allocation2 + $0x8] sm:$0xff]
        %v361 = vpack.c.bf16 %v360, %v359
        %v363 = vunpack.c.l.b16 %v361
        %v364 = vunpack.c.h.b16 %v361
        %v365 = vpack.c.b16 %v363, %v363
        %v366 = vpack.c.b16 %v364, %v364
        %369 = vst [vmem:[%s224] sm:$0xf] %v365
        %370 = vst [vmem:[%s224 + $0x4] sm:$0xf] %v366
        %v371 = vadd.f32 %v359, %v360
        %v372 = vrot.slane %v371, 4
        %v373 = vadd.f32 %v371, %v372
        %v374 = vrot.slane %v373, 2
        %v375 = vadd.f32 %v373, %v374
        %v376 = vrot.slane %v375, 1
        %v377 = vadd.f32 %v375, %v376
        %v378 = vmul.f32 %v359, %v359
        %v379 = vmul.f32 %v360, %v360
        %v380 = vadd.f32 %v378, %v379
        %v381 = vrot.slane %v380, 4
        %v382 = vadd.f32 %v380, %v381
        %v383 = vrot.slane %v382, 2
        %v384 = vadd.f32 %v382, %v383
        %v385 = vrot.slane %v384, 1
        %v386 = vadd.f32 %v384, %v385
        %v387 = vlaneseq
        %v388 = vshrl.u32 %v387, 7
        %vm389 = vcmp.eq.s32.totalorder %v388, 0
        %vm390 = vcmp.eq.s32.totalorder %v388, 1
        %v391 = vsel %vm390, %v386, 0.0
        %v392 = vsel %vm389, %v377, %v391
        %393 = vst [vmem:[%s229] sm:$0xff] %v392
      $region36: #{_lambda_.5} parent=27 // pred_fallthru
        _
      %s394 = smul.u32 2, %s19
      %p395 = scmp.lt.s32.totalorder %s394, 3
      %s396 = scalar_select %p395, %s394, 3
      %s397 = smul.addr %s396, 4
      %s398 = scalar_lea.vmem %s2, %s397
      %p399 = scmp.lt.s32.totalorder %s19, 1
      %s400 = scalar_select %p399, %s19, 1
      %s401 = smul.addr %s400, 8
      %s402 = scalar_lea.vmem %s3, %s401
      // Predicated region
      $region37: #{_lambda_.5} parent=27 // pred_check
        %p403 = pneg %p99
      $region38: #{_lambda_.5} parent=27 // pred_check_branch
        %405 = sbr.rel (%p403) target = $region40
      $region39: #{_lambda_.5} parent=27 // pred_region
        %s406 = smul.u32 2, %s19
      $region40: #{_lambda_.5} parent=27 // pred_fallthru
        _
      // Predicated region
      $region41: #{_lambda_.5} parent=27 // pred_check
        %p407 = pneg %p125
      $region42: #{_lambda_.5} parent=27 // pred_check_branch
        %409 = sbr.rel (%p407) target = $region44
      $region43: #{_lambda_.5} parent=27 // pred_region
        _
      $region44: #{_lambda_.5} parent=27 // pred_fallthru
        _
    $region28: #{_lambda_.5} parent=5 // pred_fallthru
      _
    %p410 = scmp.le.s32.totalorder 2, %s10
    // Predicated region
    $region45: #{_lambda_.5} parent=5 // pred_check
      %p411 = pneg %p410
    $region46: #{_lambda_.5} parent=5 // pred_check_branch
      %413 = sbr.rel (%p411) target = $region48
    $region47: #{_lambda_.5} parent=5 // pred_region
      %s414 = ssub.s32 %s10, 2
      // Predicated region
      $region49: #{_lambda_.5} parent=47 // pred_check
        %p415 = pneg %p105
      $region50: #{_lambda_.5} parent=47 // pred_check_branch
        %417 = sbr.rel (%p415) target = $region52
      $region51: #{_lambda_.5} parent=47 // pred_region
        %s418 = smul.u32 2, %s21
        %p419 = scmp.lt.s32.totalorder %s418, 3
        %s420 = scalar_select %p419, %s418, 3
        %s421 = smul.addr %s420, 4
        %s422 = scalar_lea.vmem %s2, %s421
      $region52: #{_lambda_.5} parent=47 // pred_fallthru
        _
      // Predicated region
      $region53: #{_lambda_.5} parent=47 // pred_check
        %p423 = pneg %p131
      $region54: #{_lambda_.5} parent=47 // pred_check_branch
        %425 = sbr.rel (%p423) target = $region56
      $region55: #{_lambda_.5} parent=47 // pred_region
        %p426 = scmp.lt.s32.totalorder %s21, 1
        %s427 = scalar_select %p426, %s21, 1
        %s428 = smul.addr %s427, 8
        %s429 = scalar_lea.vmem %s3, %s428
      $region56: #{_lambda_.5} parent=47 // pred_fallthru
        _
    $region48: #{_lambda_.5} parent=5 // pred_fallthru
      _
  $region6: #{_lambda_.5} parent=0 // loop_footer
    %s14 = sadd.s32 1, %s10
  $region7: #{_lambda_.5} parent=0 // loop_footer_branch
    %9 = sbr.rel target = $region3
  $region8: #{_lambda_.5} parent=0 // loop_exit
    _

// kernel: _lambda_.6
$region0: #{_lambda_.6}
  #allocation0 [shape = 'u32[]', space=smem, size = 0x4, offset = 0x4, fixed_abs, tag = 'smem constant byte address 0x4 - core index']
  #allocation1 [shape = 'u32[144,128]{1,0:T(1,128)}', space=vmem, size = 0x12000, scoped, tag = 'internal scratch']
  %s0 = inlined_call_operand.vmem [shape: bf16[32,128], index: 0, kind: input, shape index: {}]
  %s1 = inlined_call_operand.vmem [shape: f32[1,128], index: 1, kind: input, shape index: {}]
  %s2 = inlined_call_operand.vmem [shape: f32[1,128], index: 2, kind: input, shape index: {}]
  %s3 = inlined_call_operand.vmem [shape: bf16[32,128], index: 3, kind: output, shape index: {}]
  %s4 = sld [smem:[#allocation0]]
  $region45: #{_lambda_.6} parent=0
    _
  %s6 = ssub.s32 1, %s4
  %s7 = scalar_select 0, %s6, %s4
  loop: start=0, step=1, limit=4
  $region2: #{_lambda_.6} parent=0 // loop_pre_header
    _
  $region3: #{_lambda_.6} parent=0 // loop_header
    %s9 = sphi 0, %s13
    %p10 = scmp.ge.s32.totalorder %s9, 4
    %s19 = sphi 0, %s21
    %s22 = sphi 0, %s19
    %s23 = sphi 0, %s22
    %s39 = sphi 0, %s23
    %s43 = sphi 0, %s43
    %s45 = sphi 0, %s43
    %s46 = sphi 0, %s45
    %s60 = sphi 0, %s46
    %s64 = sphi 0, %s64
    %s66 = sphi 0, %s64
    %s67 = sphi 0, %s66
    %s81 = sphi 0, %s67
    %s87 = sphi 0, %s89
    %s90 = sphi 0, %s87
    %s91 = sphi 0, %s90
    %s107 = sphi 0, %s91
  $region4: #{_lambda_.6} parent=0 // loop_header_branch
    %12 = sbr.rel (%p10) target = $region8
  $region5: #{_lambda_.6} parent=0 // loop_body
    %s14 = ssub.s32 %s9, 1
    %s15 = ssub.s32 %s9, 2
    %s16 = sadd.s32 %s9, 1
    %s17 = ssub.s32 %s9, %s16
    %p18 = scmp.eq.s32.totalorder %s17, 0
    %s20 = sadd.s32 %s19, 1
    %s21 = scalar_select %p18, %s19, %s20
    %p24 = pneg %p18
    %p25 = scmp.eq.s32.totalorder %s9, 1
    %p26 = por %p24, %p25
    %p27 = scmp.ne.s32.totalorder %s19, %s22
    %p28 = scmp.eq.s32.totalorder %s9, 0
    %p29 = por %p27, %p28
    %p30 = scmp.ne.s32.totalorder %s19, %s22
    %p31 = scmp.eq.s32.totalorder %s14, 1
    %p32 = por %p30, %p31
    %p33 = scmp.ne.s32.totalorder %s22, %s23
    %p34 = scmp.eq.s32.totalorder %s14, 0
    %p35 = por %p33, %p34
    %p36 = scmp.ne.s32.totalorder %s22, %s23
    %p37 = scmp.eq.s32.totalorder %s15, 1
    %p38 = por %p36, %p37
    %p40 = scmp.ne.s32.totalorder %s23, %s39
    %p41 = scmp.eq.s32.totalorder %s15, 0
    %p42 = por %p40, %p41
    %s44 = sadd.s32 %s43, 1
    %p47 = scmp.eq.s32.totalorder %s9, 1
    %p48 = scmp.ne.s32.totalorder %s43, %s45
    %p49 = scmp.eq.s32.totalorder %s9, 0
    %p50 = por %p48, %p49
    %p51 = scmp.ne.s32.totalorder %s43, %s45
    %p52 = scmp.eq.s32.totalorder %s14, 1
    %p53 = por %p51, %p52
    %p54 = scmp.ne.s32.totalorder %s45, %s46
    %p55 = scmp.eq.s32.totalorder %s14, 0
    %p56 = por %p54, %p55
    %p57 = scmp.ne.s32.totalorder %s45, %s46
    %p58 = scmp.eq.s32.totalorder %s15, 1
    %p59 = por %p57, %p58
    %p61 = scmp.ne.s32.totalorder %s46, %s60
    %p62 = scmp.eq.s32.totalorder %s15, 0
    %p63 = por %p61, %p62
    %s65 = sadd.s32 %s64, 1
    %p68 = scmp.eq.s32.totalorder %s9, 1
    %p69 = scmp.ne.s32.totalorder %s64, %s66
    %p70 = scmp.eq.s32.totalorder %s9, 0
    %p71 = por %p69, %p70
    %p72 = scmp.ne.s32.totalorder %s64, %s66
    %p73 = scmp.eq.s32.totalorder %s14, 1
    %p74 = por %p72, %p73
    %p75 = scmp.ne.s32.totalorder %s66, %s67
    %p76 = scmp.eq.s32.totalorder %s14, 0
    %p77 = por %p75, %p76
    %p78 = scmp.ne.s32.totalorder %s66, %s67
    %p79 = scmp.eq.s32.totalorder %s15, 1
    %p80 = por %p78, %p79
    %p82 = scmp.ne.s32.totalorder %s67, %s81
    %p83 = scmp.eq.s32.totalorder %s15, 0
    %p84 = por %p82, %p83
    %s85 = ssub.s32 %s9, %s16
    %p86 = scmp.eq.s32.totalorder %s85, 0
    %s88 = sadd.s32 %s87, 1
    %s89 = scalar_select %p86, %s87, %s88
    %p92 = pneg %p86
    %p93 = scmp.eq.s32.totalorder %s9, 1
    %p94 = por %p92, %p93
    %p95 = scmp.ne.s32.totalorder %s87, %s90
    %p96 = scmp.eq.s32.totalorder %s9, 0
    %p97 = por %p95, %p96
    %p98 = scmp.ne.s32.totalorder %s87, %s90
    %p99 = scmp.eq.s32.totalorder %s14, 1
    %p100 = por %p98, %p99
    %p101 = scmp.ne.s32.totalorder %s90, %s91
    %p102 = scmp.eq.s32.totalorder %s14, 0
    %p103 = por %p101, %p102
    %p104 = scmp.ne.s32.totalorder %s90, %s91
    %p105 = scmp.eq.s32.totalorder %s15, 1
    %p106 = por %p104, %p105
    %p108 = scmp.ne.s32.totalorder %s91, %s107
    %p109 = scmp.eq.s32.totalorder %s15, 0
    %p110 = por %p108, %p109
    %p111 = scmp.le.s32.totalorder 1, %s9
    %p112 = scmp.lt.s32.totalorder %s9, 3
    %p113 = pnand %p111, %p112
    %p114 = pneg %p113
    // Predicated region
    $region9: #{_lambda_.6} parent=5 // pred_check
      _
    $region10: #{_lambda_.6} parent=5 // pred_check_branch
      %116 = sbr.rel (%p113) target = $region12
    $region11: #{_lambda_.6} parent=5 // pred_region
      %s117 = ssub.s32 %s9, 1
      // Predicated region
      $region13: #{_lambda_.6} parent=11 // pred_check
        %p118 = pneg %p56
      $region14: #{_lambda_.6} parent=11 // pred_check_branch
        %120 = sbr.rel (%p118) target = $region16
      $region15: #{_lambda_.6} parent=11 // pred_region
        _
      $region16: #{_lambda_.6} parent=11 // pred_fallthru
        _
      // Predicated region
      $region17: #{_lambda_.6} parent=11 // pred_check
        %p121 = pneg %p77
      $region18: #{_lambda_.6} parent=11 // pred_check_branch
        %123 = sbr.rel (%p121) target = $region20
      $region19: #{_lambda_.6} parent=11 // pred_region
        _
      $region20: #{_lambda_.6} parent=11 // pred_fallthru
        _
    $region12: #{_lambda_.6} parent=5 // pred_fallthru
      _
    %p124 = scmp.lt.s32.totalorder %s9, 2
    // Predicated region
    $region21: #{_lambda_.6} parent=5 // pred_check
      %p125 = pneg %p124
    $region22: #{_lambda_.6} parent=5 // pred_check_branch
      %127 = sbr.rel (%p125) target = $region24
    $region23: #{_lambda_.6} parent=5 // pred_region
      // Predicated region
      $region25: #{_lambda_.6} parent=23 // pred_check
        %p128 = pneg %p29
      $region26: #{_lambda_.6} parent=23 // pred_check_branch
        %130 = sbr.rel (%p128) target = $region28
      $region27: #{_lambda_.6} parent=23 // pred_region
        %s131 = smul.u32 2, %s9
        %p132 = scmp.lt.s32.totalorder %s131, 3
        %s133 = scalar_select %p132, %s131, 3
        %s134 = smul.addr %s133, 4
        %s135 = scalar_lea.vmem %s0, %s134
        %s136 = smul.u32 2, %s9
      $region28: #{_lambda_.6} parent=23 // pred_fallthru
        _
    $region24: #{_lambda_.6} parent=5 // pred_fallthru
      _
    %p137 = scmp.le.s32.totalorder 1, %s9
    %p138 = scmp.lt.s32.totalorder %s9, 3
    %p139 = pnand %p137, %p138
    %p140 = pneg %p139
    // Predicated region
    $region29: #{_lambda_.6} parent=5 // pred_check
      _
    $region30: #{_lambda_.6} parent=5 // pred_check_branch
      %142 = sbr.rel (%p139) target = $region32
    $region31: #{_lambda_.6} parent=5 // pred_region
      %s143 = ssub.s32 %s9, 1
      %s144 = smul.u32 2, %s14
      %p145 = scmp.lt.s32.totalorder %s144, 3
      %s146 = scalar_select %p145, %s144, 3
      %s147 = smul.addr %s146, 4
      %s148 = scalar_lea.vmem %s0, %s147
      %p149 = pneg %p35
      %p150 = pneg %p32
      %p151 = pneg %p56
      %p152 = pneg %p53
      %p153 = pneg %p77
      %p154 = pneg %p74
      %p155 = pneg %p103
      %p156 = pneg %p100
      %s157 = smul.u32 2, %s14
      %p158 = scmp.lt.s32.totalorder %s157, 3
      %s159 = scalar_select %p158, %s157, 3
      %s160 = smul.addr %s159, 4
      %s161 = scalar_lea.vmem %s3, %s160
      %s162 = smul.u32 2, %s14
      %p163 = scmp.lt.s32.totalorder %s162, 3
      %s164 = scalar_select %p163, %s162, 3
      %s165 = smul.addr %s164, 4
      %s166 = scalar_lea.vmem %s0, %s165
      %s167 = smul.u32 2, %s14
      %s168 = smul.u32 2, %s14
      %p169 = scmp.lt.s32.totalorder %s168, 3
      %s170 = scalar_select %p169, %s168, 3
      %s171 = smul.addr %s170, 4
      %s172 = scalar_lea.vmem %s3, %s171
      %s173 = smul.u32 2, %s14
      %v174 = vld [vmem:[%s166] sm:$0xf]
      %v175 = vld [vmem:[%s166 + $0x4] sm:$0xf]
      %v176 = vunpack.c.l.bf16 %v174
      %v177 = vunpack.c.l.bf16 %v175
      %v178 = vld [vmem:[%s1] sm:$0x1]
      %v180 = vlaneseq
      %v181 = vshrl.u32 %v180, 7
      %v182 = vsub.s32 0, %v181
      %v183 = vrot.slane %v178, %v182
      %v185 = vmul.f32 %v176, %v183
      %v186 = vmul.f32 %v177, %v183
      %v187 = vld [vmem:[%s2] sm:$0x1]
      %v189 = vlaneseq
      %v190 = vshrl.u32 %v189, 7
      %v191 = vsub.s32 0, %v190
      %v192 = vrot.slane %v187, %v191
      %v194 = vadd.f32 %v185, %v192
      %v195 = vadd.f32 %v186, %v192
      %vm196 = vcmp.ge.f32.partialorder %v194, 0.0
      %vm197 = vcmp.ge.f32.partialorder %v195, 0.0
      %v198 = vmul.f32 %v194, 0.2
      %v199 = vmul.f32 %v195, 0.2
      %v200 = vsel %vm196, %v194, %v198
      %v201 = vsel %vm197, %v195, %v199
      %v202 = vpack.c.bf16 %v201, %v200
      %v204 = vunpack.c.l.b16 %v202
      %v205 = vunpack.c.h.b16 %v202
      %v206 = vpack.c.b16 %v204, %v204
      %v207 = vpack.c.b16 %v205, %v205
      %210 = vst [vmem:[%s172] sm:$0xf] %v206
      %211 = vst [vmem:[%s172 + $0x4] sm:$0xf] %v207
      %s212 = smul.u32 2, %s14
      %p213 = scmp.lt.s32.totalorder %s212, 3
      %s214 = scalar_select %p213, %s212, 3
      %s215 = smul.addr %s214, 4
      %s216 = scalar_lea.vmem %s3, %s215
      // Predicated region
      $region33: #{_lambda_.6} parent=31 // pred_check
        %p217 = pneg %p100
      $region34: #{_lambda_.6} parent=31 // pred_check_branch
        %219 = sbr.rel (%p217) target = $region36
      $region35: #{_lambda_.6} parent=31 // pred_region
        %s220 = smul.u32 2, %s14
      $region36: #{_lambda_.6} parent=31 // pred_fallthru
        _
    $region32: #{_lambda_.6} parent=5 // pred_fallthru
      _
    %p221 = scmp.le.s32.totalorder 2, %s9
    // Predicated region
    $region37: #{_lambda_.6} parent=5 // pred_check
      %p222 = pneg %p221
    $region38: #{_lambda_.6} parent=5 // pred_check_branch
      %224 = sbr.rel (%p222) target = $region40
    $region39: #{_lambda_.6} parent=5 // pred_region
      %s225 = ssub.s32 %s9, 2
      // Predicated region
      $region41: #{_lambda_.6} parent=39 // pred_check
        %p226 = pneg %p106
      $region42: #{_lambda_.6} parent=39 // pred_check_branch
        %228 = sbr.rel (%p226) target = $region44
      $region43: #{_lambda_.6} parent=39 // pred_region
        %s229 = smul.u32 2, %s15
        %p230 = scmp.lt.s32.totalorder %s229, 3
        %s231 = scalar_select %p230, %s229, 3
        %s232 = smul.addr %s231, 4
        %s233 = scalar_lea.vmem %s3, %s232
      $region44: #{_lambda_.6} parent=39 // pred_fallthru
        _
    $region40: #{_lambda_.6} parent=5 // pred_fallthru
      _
  $region6: #{_lambda_.6} parent=0 // loop_footer
    %s13 = sadd.s32 1, %s9
  $region7: #{_lambda_.6} parent=0 // loop_footer_branch
    %8 = sbr.rel target = $region3
  $region8: #{_lambda_.6} parent=0 // loop_exit
    _

// kernel: _lambda_.7
$region0: #{_lambda_.7}
  #allocation0 [shape = 'u32[]', space=smem, size = 0x4, offset = 0x4, fixed_abs, tag = 'smem constant byte address 0x4 - core index']
  #allocation1 [shape = 'u32[144,128]{1,0:T(1,128)}', space=vmem, size = 0x12000, scoped, tag = 'internal scratch']
  #allocation2 [shape = 'f32[8,128]{1,0:T(8,128)}', space=vmem, size = 0x1000, scoped, tag = 'scratch operand']
  %s0 = inlined_call_operand.vmem [shape: bf16[8,256], index: 0, kind: input, shape index: {}]
  %s1 = inlined_call_operand.vmem [shape: bf16[256,128], index: 1, kind: input, shape index: {}]
  %s2 = inlined_call_operand.vmem [shape: f32[1,128], index: 2, kind: input, shape index: {}]
  %s3 = inlined_call_operand.vmem [shape: f32[8,128], index: 3, kind: output, shape index: {}]
  %s4 = sld [smem:[#allocation0]]
  $region30: #{_lambda_.7} parent=0
    _
  %s6 = ssub.s32 1, %s4
  %s7 = scalar_select 0, %s6, %s4
  // Predicated region
  $region2: #{_lambda_.7} parent=0 // pred_check
    _
  $region3: #{_lambda_.7} parent=0 // pred_check_branch
    %9 = sbr.rel (0) target = $region5
  $region4: #{_lambda_.7} parent=0 // pred_region
    _
  $region5: #{_lambda_.7} parent=0 // pred_fallthru
    _
  // Predicated region
  $region6: #{_lambda_.7} parent=0 // pred_check
    _
  $region7: #{_lambda_.7} parent=0 // pred_check_branch
    %11 = sbr.rel (0) target = $region9
  $region8: #{_lambda_.7} parent=0 // pred_region
    _
  $region9: #{_lambda_.7} parent=0 // pred_fallthru
    _
  // Predicated region
  $region10: #{_lambda_.7} parent=0 // pred_check
    _
  $region11: #{_lambda_.7} parent=0 // pred_check_branch
    %13 = sbr.rel (0) target = $region13
  $region12: #{_lambda_.7} parent=0 // pred_region
    _
  $region13: #{_lambda_.7} parent=0 // pred_fallthru
    _
  %p15 = scmp.eq.s32.totalorder 0, 0
  // Predicated region
  $region14: #{_lambda_.7} parent=0 // pred_check
    %p16 = pneg %p15
  $region15: #{_lambda_.7} parent=0 // pred_check_branch
    %18 = sbr.rel (%p16) target = $region17
  $region16: #{_lambda_.7} parent=0 // pred_region
    %19 = vst [vmem:[#allocation2] sm:$0xff] 0.0
  $region17: #{_lambda_.7} parent=0 // pred_fallthru
    _
  %v20 = vld [vmem:[#allocation2] sm:$0xff]
  %v21 = vld [vmem:[%s0] sm:$0xff]
  %v22 = vld [vmem:[%s1] sm:$0xf]
  %v23 = vld [vmem:[%s1 + $0x4] sm:$0xf]
  %v24 = vld [vmem:[%s1 + $0x8] sm:$0xf]
  %v25 = vld [vmem:[%s1 + $0xc] sm:$0xf]
  %v26 = vld [vmem:[%s1 + $0x10] sm:$0xf]
  %v27 = vld [vmem:[%s1 + $0x14] sm:$0xf]
  %v28 = vld [vmem:[%s1 + $0x18] sm:$0xf]
  %v29 = vld [vmem:[%s1 + $0x1c] sm:$0xf]
  %v30 = vld [vmem:[%s1 + $0x20] sm:$0xf]
  %v31 = vld [vmem:[%s1 + $0x24] sm:$0xf]
  %v32 = vld [vmem:[%s1 + $0x28] sm:$0xf]
  %v33 = vld [vmem:[%s1 + $0x2c] sm:$0xf]
  %v34 = vld [vmem:[%s1 + $0x30] sm:$0xf]
  %v35 = vld [vmem:[%s1 + $0x34] sm:$0xf]
  %v36 = vld [vmem:[%s1 + $0x38] sm:$0xf]
  %v37 = vld [vmem:[%s1 + $0x3c] sm:$0xf]
  %v38 = vld [vmem:[%s1 + $0x40] sm:$0xf]
  %v39 = vld [vmem:[%s1 + $0x44] sm:$0xf]
  %v40 = vld [vmem:[%s1 + $0x48] sm:$0xf]
  %v41 = vld [vmem:[%s1 + $0x4c] sm:$0xf]
  %v42 = vld [vmem:[%s1 + $0x50] sm:$0xf]
  %v43 = vld [vmem:[%s1 + $0x54] sm:$0xf]
  %v44 = vld [vmem:[%s1 + $0x58] sm:$0xf]
  %v45 = vld [vmem:[%s1 + $0x5c] sm:$0xf]
  %v46 = vld [vmem:[%s1 + $0x60] sm:$0xf]
  %v47 = vld [vmem:[%s1 + $0x64] sm:$0xf]
  %v48 = vld [vmem:[%s1 + $0x68] sm:$0xf]
  %v49 = vld [vmem:[%s1 + $0x6c] sm:$0xf]
  %v50 = vld [vmem:[%s1 + $0x70] sm:$0xf]
  %v51 = vld [vmem:[%s1 + $0x74] sm:$0xf]
  %v52 = vld [vmem:[%s1 + $0x78] sm:$0xf]
  %v53 = vld [vmem:[%s1 + $0x7c] sm:$0xf]
  %v55 = vunpack.c.l.b16 %v21
  %v56 = vunpack.c.h.b16 %v21
  %v57 = vpack.c.b16 %v55, %v55
  %v58 = vpack.c.b16 %v56, %v56
  %v93 = vunpack.c.l.b16 %v22
  %v94 = vunpack.c.l.b16 %v23
  %v95 = vunpack.c.l.b16 %v24
  %v96 = vunpack.c.l.b16 %v25
  %v97 = vunpack.c.l.b16 %v26
  %v98 = vunpack.c.l.b16 %v27
  %v99 = vunpack.c.l.b16 %v28
  %v100 = vunpack.c.l.b16 %v29
  %v101 = vunpack.c.l.b16 %v30
  %v102 = vunpack.c.l.b16 %v31
  %v103 = vunpack.c.l.b16 %v32
  %v104 = vunpack.c.l.b16 %v33
  %v105 = vunpack.c.l.b16 %v34
  %v106 = vunpack.c.l.b16 %v35
  %v107 = vunpack.c.l.b16 %v36
  %v108 = vunpack.c.l.b16 %v37
  %v109 = vunpack.c.l.b16 %v38
  %v110 = vunpack.c.l.b16 %v39
  %v111 = vunpack.c.l.b16 %v40
  %v112 = vunpack.c.l.b16 %v41
  %v113 = vunpack.c.l.b16 %v42
  %v114 = vunpack.c.l.b16 %v43
  %v115 = vunpack.c.l.b16 %v44
  %v116 = vunpack.c.l.b16 %v45
  %v117 = vunpack.c.l.b16 %v46
  %v118 = vunpack.c.l.b16 %v47
  %v119 = vunpack.c.l.b16 %v48
  %v120 = vunpack.c.l.b16 %v49
  %v121 = vunpack.c.l.b16 %v50
  %v122 = vunpack.c.l.b16 %v51
  %v123 = vunpack.c.l.b16 %v52
  %v124 = vunpack.c.l.b16 %v53
  %v125 = vpack.c.b16 %v94, %v93
  %v126 = vpack.c.b16 %v96, %v95
  %v127 = vpack.c.b16 %v98, %v97
  %v128 = vpack.c.b16 %v100, %v99
  %v129 = vpack.c.b16 %v102, %v101
  %v130 = vpack.c.b16 %v104, %v103
  %v131 = vpack.c.b16 %v106, %v105
  %v132 = vpack.c.b16 %v108, %v107
  %v133 = vpack.c.b16 %v110, %v109
  %v134 = vpack.c.b16 %v112, %v111
  %v135 = vpack.c.b16 %v114, %v113
  %v136 = vpack.c.b16 %v116, %v115
  %v137 = vpack.c.b16 %v118, %v117
  %v138 = vpack.c.b16 %v120, %v119
  %v139 = vpack.c.b16 %v122, %v121
  %v140 = vpack.c.b16 %v124, %v123
  %157 = vmatprep.subr.bf16.mxu0 0
  %158 = vmatpush1.bf16.msra.mxu0 %v132
  %159 = vmatprep.subr.bf16.mxu0 0
  %160 = vmatpush1.bf16.msra.mxu0 %v131
  %161 = vmatprep.subr.bf16.mxu0 0
  %162 = vmatpush1.bf16.msra.mxu0 %v130
  %163 = vmatprep.subr.bf16.mxu0 0
  %164 = vmatpush1.bf16.msra.mxu0 %v129
  %165 = vmatprep.subr.bf16.mxu0 0
  %166 = vmatpush1.bf16.msra.mxu0 %v128
  %167 = vmatprep.subr.bf16.mxu0 0
  %168 = vmatpush1.bf16.msra.mxu0 %v127
  %169 = vmatprep.subr.bf16.mxu0 0
  %170 = vmatpush1.bf16.msra.mxu0 %v126
  %171 = vmatprep.subr.bf16.mxu0 0
  %172 = vmatpush1.bf16.msra.mxu0 %v125
  %173 = vmatprep.subr.bf16.mxu0 0
  %174 = vmatpush2.bf16.msra.mxu0 %v140
  %175 = vmatprep.subr.bf16.mxu0 0
  %176 = vmatpush2.bf16.msra.mxu0 %v139
  %177 = vmatprep.subr.bf16.mxu0 0
  %178 = vmatpush2.bf16.msra.mxu0 %v138
  %179 = vmatprep.subr.bf16.mxu0 0
  %180 = vmatpush2.bf16.msra.mxu0 %v137
  %181 = vmatprep.subr.bf16.mxu0 0
  %182 = vmatpush2.bf16.msra.mxu0 %v136
  %183 = vmatprep.subr.bf16.mxu0 0
  %184 = vmatpush2.bf16.msra.mxu0 %v135
  %185 = vmatprep.subr.bf16.mxu0 0
  %186 = vmatpush2.bf16.msra.mxu0 %v134
  %187 = vmatprep.subr.bf16.mxu0 0
  %188 = vmatpush2.bf16.msra.mxu0 %v133
  %189 = vmatprep.mubr.bf16.mxu0 %v58
  %190 = vmatmul.mubr.bf16.gmra.mxu0 %v57
  %v191 = vpop.f32.mrf.mxu0
  %v192 = vadd.f32 0.0, %v191
  %v193 = vpop.f32.mrf.mxu0
  %v194 = vpop.f32.mrf.mxu0
  %v195 = vpop.f32.mrf.mxu0
  %196 = vdwg.mxu0
  %v197 = vadd.f32 %v20, %v192
  %198 = vst [vmem:[#allocation2] sm:$0xff] %v197
  // Predicated region
  $region18: #{_lambda_.7} parent=0 // pred_check
    %p199 = pneg %p15
  $region19: #{_lambda_.7} parent=0 // pred_check_branch
    %201 = sbr.rel (%p199) target = $region21
  $region20: #{_lambda_.7} parent=0 // pred_region
    %v202 = vld [vmem:[#allocation2] sm:$0xff]
    %v203 = vld [vmem:[%s2] sm:$0x1]
    %v205 = vlaneseq
    %v206 = vshrl.u32 %v205, 7
    %v207 = vsub.s32 0, %v206
    %v208 = vrot.slane %v203, %v207
    %v210 = vadd.f32 %v202, %v208
    %v211 = vxor.u32 %v210, 2147483648
    %v212 = vmul.f32 %v211, 1.442695
    %v213 = vpow.pop %v212
    %v214 = vadd.f32 %v213, 1.0
    %v215 = vrcp.pop %v214
    %v216 = vmul.f32 1.0, %v215
    %217 = vst [vmem:[%s3] sm:$0xff] %v216
  $region21: #{_lambda_.7} parent=0 // pred_fallthru
    _
  // Predicated region
  $region22: #{_lambda_.7} parent=0 // pred_check
    _
  $region23: #{_lambda_.7} parent=0 // pred_check_branch
    %219 = sbr.rel (0) target = $region25
  $region24: #{_lambda_.7} parent=0 // pred_region
    _
  $region25: #{_lambda_.7} parent=0 // pred_fallthru
    _
  // Predicated region
  $region26: #{_lambda_.7} parent=0 // pred_check
    _
  $region27: #{_lambda_.7} parent=0 // pred_check_branch
    %221 = sbr.rel (0) target = $region29
  $region28: #{_lambda_.7} parent=0 // pred_region
    _
  $region29: #{_lambda_.7} parent=0 // pred_fallthru
    _

</llo_original>
